<compile_context>
chip_gen: v7x
topology: tpu7x:2x2x1
jax: 0.10.0
libtpu: 0.0.40
codegen_flags: <defaults>
</compile_context>

<pallas_src>
import functools
import math

import jax
import jax.numpy as jnp
from jax.experimental import pallas as pl
from jax.experimental.pallas import tpu as pltpu

N_HEADS = 3
D_MODEL = 2        # fixed by the hard-coded 2x2 Q/K/V weights in Attention.__init__
N_FEATURES = 2
FF_UNITS = 8

NEG_INF = -1.0e9   # matches masked_fill(mask == 0, -1000000000.0)


def _proj2(x, w, b):
    """Position-wise linear with contraction dim 2 as VPU broadcast-FMAs.

    x: (..., 2), w: (2, K) in (in, out) layout, b: (1, K)  ->  (..., K)
    """
    return x[..., 0:1] * w[0:1, :] + x[..., 1:2] * w[1:2, :] + b


def _softmax_lastdim(s):
    m = jnp.max(s, axis=-1, keepdims=True)
    e = jnp.exp(s - m)
    denom = jnp.sum(e, axis=-1, keepdims=True)
    return e * pl.reciprocal(denom, approx=False)


def decoder_self_attn_kernel(xs_ref, p_ref, out_ref, *, B, Lq, Ls, causal):
    """Single invocation: whole problem resident in VMEM, no MXU.

    xs_ref : (B*Lq + B*Ls, 2)  [flattened decoder input ; flattened encoder states]
    p_ref  : (3, 26)  rows 0-1 = [Wq*inv_sqrt_dk | Wk | Wv | Wo1_eff | Wo2_eff | W1 | W2^T]
                      row 2    = [bq*inv_sqrt_dk | bk | bv | bo1 | bo2 | b1 | b2 | 0-pad]
    out_ref: (B*Lq, 2)  lane-collapsed single output tile
    """
    data = xs_ref[...]                                    # (B*Lq + B*Ls, 2)
    P = p_ref[...]                                        # (3, 26)

    # Split / un-flatten the data slab (leading-dim reshape only -> layout no-op).
    x = data[0:B * Lq, :].reshape(B, Lq, N_FEATURES)      # decoder input (queries & self-keys)
    st = data[B * Lq:, :].reshape(B, Ls, D_MODEL)         # encoder states (cross keys/values)

    # Static lane/sublane slices of the packed parameter slab (free).
    W = P[0:2, :]
    brow = P[2:3, :]
    wq, wk, wv = W[:, 0:2], W[:, 2:4], W[:, 4:6]          # wq already scaled by 1/sqrt(d_k)
    wo1, wo2 = W[:, 6:8], W[:, 8:10]
    w1, w2t = W[:, 10:18], W[:, 18:26]
    bq, bk, bv = brow[:, 0:2], brow[:, 2:4], brow[:, 4:6]  # bq already scaled by 1/sqrt(d_k)
    bo1, bo2 = brow[:, 6:8], brow[:, 8:10]
    b1, b2 = brow[:, 10:18], brow[:, 18:20]

    def attention(q, keys, mask_causal):
        # All heads share the hard-coded Q/K/V weights -> compute one head's context.
        Lk = keys.shape[1]
        pq = _proj2(q, wq, bq)                            # (B, lq, 2)  (pre-scaled)
        pk = _proj2(keys, wk, bk)                         # (B, Lk, 2)
        pv = _proj2(keys, wv, bv)                         # (B, Lk, 2)  (proj_values=True)

        # scores[b,l,m] = sum_d pq[b,l,d] * pk[b,m,d] : VPU multiplies + 2-lane reduces,
        # assembled per key position m (static unroll) -> no MXU, no transposes.
        cols = [jnp.sum(pq * pk[:, m:m + 1, :], axis=-1, keepdims=True) for m in range(Lk)]
        scores = jnp.concatenate(cols, axis=-1)           # (B, lq, Lk)

        if mask_causal:
            row = jax.lax.broadcasted_iota(jnp.int32, scores.shape, 1)
            col = jax.lax.broadcasted_iota(jnp.int32, scores.shape, 2)
            scores = jnp.where(col <= row, scores, NEG_INF)

        alphas = _softmax_lastdim(scores)                 # (B, lq, Lk)

        # ctx = alphas @ values : contraction over m as VPU broadcast-FMAs.
        ctx = alphas[:, :, 0:1] * pv[:, 0:1, :]
        for m in range(1, Lk):
            ctx = ctx + alphas[:, :, m:m + 1] * pv[:, m:m + 1, :]
        return ctx                                        # (B, lq, 2)

    # Self-attention; concat(ctx, ctx, ctx) @ Wo1 == ctx @ (sum of head slices of Wo1).
    att1 = _proj2(attention(x, x, causal), wo1, bo1)      # (B, Lq, 2)
    # Cross-attention with encoder states as keys/values.
    att2 = _proj2(attention(att1, st, False), wo2, bo2)   # (B, Lq, 2)

    # FFN: Linear(2->8) -> ReLU -> Linear(8->2), all on the VPU (K=8 as lane reduces).
    h1 = jnp.maximum(_proj2(att2, w1, b1), 0.0)           # (B, Lq, 8)
    y0 = jnp.sum(h1 * w2t[0:1, :], axis=-1, keepdims=True)
    y1 = jnp.sum(h1 * w2t[1:2, :], axis=-1, keepdims=True)
    out = jnp.concatenate([y0, y1], axis=-1) + b2         # (B, Lq, 2)

    # Single lane-collapsed store (one tile, one writeback DMA).
    out_ref[...] = out.reshape(B * Lq, N_FEATURES).astype(out_ref.dtype)


def decoder_self_attn(query, states, packed_params, *, causal_target_mask=False):
    B, Lq, F = query.shape
    Bs, Ls, Fs = states.shape
    assert Bs == B and F == N_FEATURES and Fs == D_MODEL

    # One data slab -> one input DMA (plus one for the parameter slab).
    xs = jnp.concatenate([query.reshape(B * Lq, F), states.reshape(B * Ls, Fs)], axis=0)

    kernel = functools.partial(decoder_self_attn_kernel, B=B, Lq=Lq, Ls=Ls,
                               causal=causal_target_mask)

    # Advisory cost hint: tell XLA this custom call is tiny so it is not scheduled around.
    flops = 2 * B * (3 * (Lq + Ls) * D_MODEL * D_MODEL            # Q/K/V projections
                     + Lq * Lq * D_MODEL + Lq * Ls * D_MODEL      # scores (self + cross)
                     + Lq * Lq * D_MODEL + Lq * Ls * D_MODEL      # alphas @ values
                     + 2 * Lq * D_MODEL * D_MODEL                 # linear_out x2
                     + Lq * (D_MODEL * FF_UNITS + FF_UNITS * N_FEATURES))  # FFN
    transcendentals = B * Lq * (Lq + Ls)                           # exp() calls
    bytes_accessed = 4 * (xs.size + packed_params.size + B * Lq * N_FEATURES)

    out2d = pl.pallas_call(
        kernel,
        out_shape=jax.ShapeDtypeStruct((B * Lq, N_FEATURES), jnp.float32),
        in_specs=[pl.BlockSpec(memory_space=pltpu.MemorySpace.VMEM),
                  pl.BlockSpec(memory_space=pltpu.MemorySpace.VMEM)],
        out_specs=pl.BlockSpec(memory_space=pltpu.MemorySpace.VMEM),
        cost_estimate=pl.CostEstimate(flops=int(flops),
                                      transcendentals=int(transcendentals),
                                      bytes_accessed=int(bytes_accessed)),
    )(xs, packed_params)
    return out2d.reshape(B, Lq, N_FEATURES)


def make_params(key):
    """Module parameters in (in, out) layout (PyTorch Linear stores (out, in))."""
    wq = jnp.array([[0.0798, 0.4151], [-0.0994, 0.1561]], jnp.float32).T
    bq = jnp.array([-0.2548, 0.3911], jnp.float32)
    wk = jnp.array([[-0.3068, -0.4800], [-0.4578, -0.1488]], jnp.float32).T
    bk = jnp.array([0.3407, 0.4099], jnp.float32)
    wv = jnp.array([[-0.2710, -0.6198], [0.4265, -0.3488]], jnp.float32).T
    bv = jnp.array([-0.3975, -0.1983], jnp.float32)

    ks = jax.random.split(key, 8)

    def uinit(k, shape, fan_in):
        bound = 1.0 / math.sqrt(fan_in)
        return jax.random.uniform(k, shape, jnp.float32, -bound, bound)

    wo1 = uinit(ks[0], (N_HEADS * D_MODEL, D_MODEL), N_HEADS * D_MODEL)  # self-attn linear_out
    bo1 = uinit(ks[1], (D_MODEL,), N_HEADS * D_MODEL)
    wo2 = uinit(ks[2], (N_HEADS * D_MODEL, D_MODEL), N_HEADS * D_MODEL)  # cross-attn linear_out
    bo2 = uinit(ks[3], (D_MODEL,), N_HEADS * D_MODEL)
    w1 = uinit(ks[4], (D_MODEL, FF_UNITS), D_MODEL)
    b1 = uinit(ks[5], (FF_UNITS,), D_MODEL)
    w2 = uinit(ks[6], (FF_UNITS, N_FEATURES), FF_UNITS)
    b2 = uinit(ks[7], (N_FEATURES,), FF_UNITS)

    return (wq, bq, wk, bk, wv, bv, wo1, bo1, wo2, bo2, w1, b1, w2, b2)


def pack_params(params):
    """Pack the 14 tiny tensors into ONE (3, 26) slab; fold 1/sqrt(d_k) into wq/bq."""
    (wq, bq, wk, bk, wv, bv, wo1, bo1, wo2, bo2, w1, b1, w2, b2) = params
    D = D_MODEL
    inv_sqrt_dk = 1.0 / math.sqrt(D)
    # Heads share identical Q/K/V weights -> concat @ Wo == ctx @ (sum of head slices).
    wo1_eff = sum(wo1[h * D:(h + 1) * D, :] for h in range(N_HEADS))
    wo2_eff = sum(wo2[h * D:(h + 1) * D, :] for h in range(N_HEADS))
    w_rows = jnp.concatenate([wq * inv_sqrt_dk, wk, wv, wo1_eff, wo2_eff, w1, w2.T],
                             axis=1)                                              # (2, 26)
    b_row = jnp.concatenate([bq * inv_sqrt_dk, bk, bv, bo1, bo2, b1, b2])         # (20,)
    b_row = jnp.pad(b_row, (0, w_rows.shape[1] - b_row.shape[0]))                 # (26,)
    return jnp.concatenate([w_rows, b_row[None, :]], axis=0)                      # (3, 26)


def reference(query, states, params, *, causal_target_mask=False):
    """Pure-JAX mirror of the PyTorch forward (per-head loop, concat, linear_out)."""
    (wq, bq, wk, bk, wv, bv, wo1, bo1, wo2, bo2, w1, b1, w2, b2) = params

    def head(q, keys, mask):
        pq = q @ wq + bq
        pk = keys @ wk + bk
        vals = keys @ wv + bv
        scores = jnp.einsum('bld,bmd->blm', pq, pk) / math.sqrt(D_MODEL)
        if mask is not None:
            scores = jnp.where(mask, scores, NEG_INF)
        alphas = jax.nn.softmax(scores, axis=-1)
        return jnp.einsum('blm,bmd->bld', alphas, vals)

    def mha(q, keys, wo, bo, mask=None):
        ctxs = [head(q, keys, mask) for _ in range(N_HEADS)]
        return jnp.concatenate(ctxs, axis=-1) @ wo + bo

    tgt_mask = None
    if causal_target_mask:
        Lq = query.shape[1]
        tgt_mask = jnp.arange(Lq)[None, None, :] <= jnp.arange(Lq)[None, :, None]

    att1 = mha(query, query, wo1, bo1, mask=tgt_mask)   # self-attention
    att2 = mha(att1, states, wo2, bo2, mask=None)       # cross-attention
    return jnp.maximum(att2 @ w1 + b1, 0.0) @ w2 + b2   # FFN


if __name__ == "__main__":
    key = jax.random.PRNGKey(0)
    kq, ks, kp = jax.random.split(key, 3)

    B, LQ, LS = 2, 8, 8
    query = jax.random.normal(kq, (B, LQ, N_FEATURES), jnp.float32)   # decoder input
    states = jax.random.normal(ks, (B, LS, D_MODEL), jnp.float32)     # encoder states (init_keys)
    params = make_params(kp)
    packed = pack_params(params)

    # Default forward uses mask=None; also exercise the causal target-mask path.
    for causal in (False, True):
        out = decoder_self_attn(query, states, packed, causal_target_mask=causal)
        out = jax.block_until_ready(out)
        ref = reference(query, states, params, causal_target_mask=causal)
        assert out.shape == (B, LQ, N_FEATURES)
        assert jnp.allclose(out, ref, atol=1e-5, rtol=1e-5), f"mismatch vs reference (causal={causal})"

    # TODO(synk): arbitrary user-supplied source/target mask tensors (masked_fill) are not
    # plumbed; only mask=None and the built-in causal target mask are supported.
    print("KERNEL_OK")
</pallas_src>

<mosaic_0001>
module attributes {stable_mosaic.version = 11 : i64} {
  func.func @decoder_self_attn_kernel(%arg0: memref<32x2xf32, #tpu.memory_space<vmem>>, %arg1: memref<3x26xf32, #tpu.memory_space<vmem>>, %arg2: memref<16x2xf32, #tpu.memory_space<vmem>>) attributes {dimension_semantics = [], scalar_prefetch = 0 : i64, scratch_operands = 0 : i64, tpu.core_type = #tpu.core_type<tc>} {
    %c0 = arith.constant 0 : index
    %c0_0 = arith.constant 0 : index
    %0 = vector.load %arg0[%c0, %c0_0] : memref<32x2xf32, #tpu.memory_space<vmem>>, vector<32x2xf32>
    %c0_1 = arith.constant 0 : index
    %c0_2 = arith.constant 0 : index
    %1 = vector.load %arg1[%c0_1, %c0_2] : memref<3x26xf32, #tpu.memory_space<vmem>>, vector<3x26xf32>
    %2 = vector.extract_strided_slice %0 {offsets = [0, 0], sizes = [16, 2], strides = [1, 1]} : vector<32x2xf32> to vector<16x2xf32>
    %3 = vector.shape_cast %2 : vector<16x2xf32> to vector<2x8x2xf32>
    %4 = vector.extract_strided_slice %0 {offsets = [16, 0], sizes = [16, 2], strides = [1, 1]} : vector<32x2xf32> to vector<16x2xf32>
    %5 = vector.shape_cast %4 : vector<16x2xf32> to vector<2x8x2xf32>
    %6 = vector.extract_strided_slice %1 {offsets = [0, 0], sizes = [2, 26], strides = [1, 1]} : vector<3x26xf32> to vector<2x26xf32>
    %7 = vector.extract_strided_slice %1 {offsets = [2, 0], sizes = [1, 26], strides = [1, 1]} : vector<3x26xf32> to vector<1x26xf32>
    %8 = vector.extract_strided_slice %6 {offsets = [0, 0], sizes = [2, 2], strides = [1, 1]} : vector<2x26xf32> to vector<2x2xf32>
    %9 = vector.extract_strided_slice %6 {offsets = [0, 2], sizes = [2, 2], strides = [1, 1]} : vector<2x26xf32> to vector<2x2xf32>
    %10 = vector.extract_strided_slice %6 {offsets = [0, 4], sizes = [2, 2], strides = [1, 1]} : vector<2x26xf32> to vector<2x2xf32>
    %11 = vector.extract_strided_slice %6 {offsets = [0, 6], sizes = [2, 2], strides = [1, 1]} : vector<2x26xf32> to vector<2x2xf32>
    %12 = vector.extract_strided_slice %6 {offsets = [0, 8], sizes = [2, 2], strides = [1, 1]} : vector<2x26xf32> to vector<2x2xf32>
    %13 = vector.extract_strided_slice %6 {offsets = [0, 10], sizes = [2, 8], strides = [1, 1]} : vector<2x26xf32> to vector<2x8xf32>
    %14 = vector.extract_strided_slice %6 {offsets = [0, 18], sizes = [2, 8], strides = [1, 1]} : vector<2x26xf32> to vector<2x8xf32>
    %15 = vector.extract_strided_slice %7 {offsets = [0, 0], sizes = [1, 2], strides = [1, 1]} : vector<1x26xf32> to vector<1x2xf32>
    %16 = vector.extract_strided_slice %7 {offsets = [0, 2], sizes = [1, 2], strides = [1, 1]} : vector<1x26xf32> to vector<1x2xf32>
    %17 = vector.extract_strided_slice %7 {offsets = [0, 4], sizes = [1, 2], strides = [1, 1]} : vector<1x26xf32> to vector<1x2xf32>
    %18 = vector.extract_strided_slice %7 {offsets = [0, 6], sizes = [1, 2], strides = [1, 1]} : vector<1x26xf32> to vector<1x2xf32>
    %19 = vector.extract_strided_slice %7 {offsets = [0, 8], sizes = [1, 2], strides = [1, 1]} : vector<1x26xf32> to vector<1x2xf32>
    %20 = vector.extract_strided_slice %7 {offsets = [0, 10], sizes = [1, 8], strides = [1, 1]} : vector<1x26xf32> to vector<1x8xf32>
    %21 = vector.extract_strided_slice %7 {offsets = [0, 18], sizes = [1, 2], strides = [1, 1]} : vector<1x26xf32> to vector<1x2xf32>
    %22 = vector.extract_strided_slice %3 {offsets = [0, 0, 0], sizes = [2, 8, 1], strides = [1, 1, 1]} : vector<2x8x2xf32> to vector<2x8x1xf32>
    %23 = vector.extract_strided_slice %8 {offsets = [0, 0], sizes = [1, 2], strides = [1, 1]} : vector<2x2xf32> to vector<1x2xf32>
    %24 = vector.shape_cast %23 : vector<1x2xf32> to vector<1x1x2xf32>
    %25 = vector.broadcast %22 : vector<2x8x1xf32> to vector<2x8x2xf32>
    %26 = vector.broadcast %24 : vector<1x1x2xf32> to vector<2x8x2xf32>
    %27 = arith.mulf %25, %26 : vector<2x8x2xf32>
    %28 = vector.extract_strided_slice %3 {offsets = [0, 0, 1], sizes = [2, 8, 1], strides = [1, 1, 1]} : vector<2x8x2xf32> to vector<2x8x1xf32>
    %29 = vector.extract_strided_slice %8 {offsets = [1, 0], sizes = [1, 2], strides = [1, 1]} : vector<2x2xf32> to vector<1x2xf32>
    %30 = vector.shape_cast %29 : vector<1x2xf32> to vector<1x1x2xf32>
    %31 = vector.broadcast %28 : vector<2x8x1xf32> to vector<2x8x2xf32>
    %32 = vector.broadcast %30 : vector<1x1x2xf32> to vector<2x8x2xf32>
    %33 = arith.mulf %31, %32 : vector<2x8x2xf32>
    %34 = arith.addf %27, %33 : vector<2x8x2xf32>
    %35 = vector.shape_cast %15 : vector<1x2xf32> to vector<1x1x2xf32>
    %36 = vector.broadcast %35 : vector<1x1x2xf32> to vector<2x8x2xf32>
    %37 = arith.addf %34, %36 : vector<2x8x2xf32>
    %38 = vector.extract_strided_slice %3 {offsets = [0, 0, 0], sizes = [2, 8, 1], strides = [1, 1, 1]} : vector<2x8x2xf32> to vector<2x8x1xf32>
    %39 = vector.extract_strided_slice %9 {offsets = [0, 0], sizes = [1, 2], strides = [1, 1]} : vector<2x2xf32> to vector<1x2xf32>
    %40 = vector.shape_cast %39 : vector<1x2xf32> to vector<1x1x2xf32>
    %41 = vector.broadcast %38 : vector<2x8x1xf32> to vector<2x8x2xf32>
    %42 = vector.broadcast %40 : vector<1x1x2xf32> to vector<2x8x2xf32>
    %43 = arith.mulf %41, %42 : vector<2x8x2xf32>
    %44 = vector.extract_strided_slice %3 {offsets = [0, 0, 1], sizes = [2, 8, 1], strides = [1, 1, 1]} : vector<2x8x2xf32> to vector<2x8x1xf32>
    %45 = vector.extract_strided_slice %9 {offsets = [1, 0], sizes = [1, 2], strides = [1, 1]} : vector<2x2xf32> to vector<1x2xf32>
    %46 = vector.shape_cast %45 : vector<1x2xf32> to vector<1x1x2xf32>
    %47 = vector.broadcast %44 : vector<2x8x1xf32> to vector<2x8x2xf32>
    %48 = vector.broadcast %46 : vector<1x1x2xf32> to vector<2x8x2xf32>
    %49 = arith.mulf %47, %48 : vector<2x8x2xf32>
    %50 = arith.addf %43, %49 : vector<2x8x2xf32>
    %51 = vector.shape_cast %16 : vector<1x2xf32> to vector<1x1x2xf32>
    %52 = vector.broadcast %51 : vector<1x1x2xf32> to vector<2x8x2xf32>
    %53 = arith.addf %50, %52 : vector<2x8x2xf32>
    %54 = vector.extract_strided_slice %3 {offsets = [0, 0, 0], sizes = [2, 8, 1], strides = [1, 1, 1]} : vector<2x8x2xf32> to vector<2x8x1xf32>
    %55 = vector.extract_strided_slice %10 {offsets = [0, 0], sizes = [1, 2], strides = [1, 1]} : vector<2x2xf32> to vector<1x2xf32>
    %56 = vector.shape_cast %55 : vector<1x2xf32> to vector<1x1x2xf32>
    %57 = vector.broadcast %54 : vector<2x8x1xf32> to vector<2x8x2xf32>
    %58 = vector.broadcast %56 : vector<1x1x2xf32> to vector<2x8x2xf32>
    %59 = arith.mulf %57, %58 : vector<2x8x2xf32>
    %60 = vector.extract_strided_slice %3 {offsets = [0, 0, 1], sizes = [2, 8, 1], strides = [1, 1, 1]} : vector<2x8x2xf32> to vector<2x8x1xf32>
    %61 = vector.extract_strided_slice %10 {offsets = [1, 0], sizes = [1, 2], strides = [1, 1]} : vector<2x2xf32> to vector<1x2xf32>
    %62 = vector.shape_cast %61 : vector<1x2xf32> to vector<1x1x2xf32>
    %63 = vector.broadcast %60 : vector<2x8x1xf32> to vector<2x8x2xf32>
    %64 = vector.broadcast %62 : vector<1x1x2xf32> to vector<2x8x2xf32>
    %65 = arith.mulf %63, %64 : vector<2x8x2xf32>
    %66 = arith.addf %59, %65 : vector<2x8x2xf32>
    %67 = vector.shape_cast %17 : vector<1x2xf32> to vector<1x1x2xf32>
    %68 = vector.broadcast %67 : vector<1x1x2xf32> to vector<2x8x2xf32>
    %69 = arith.addf %66, %68 : vector<2x8x2xf32>
    %70 = vector.extract_strided_slice %53 {offsets = [0, 0, 0], sizes = [2, 1, 2], strides = [1, 1, 1]} : vector<2x8x2xf32> to vector<2x1x2xf32>
    %71 = vector.broadcast %70 : vector<2x1x2xf32> to vector<2x8x2xf32>
    %72 = arith.mulf %37, %71 : vector<2x8x2xf32>
    %cst = arith.constant dense<0.000000e+00> : vector<2x8xf32>
    %73 = vector.multi_reduction <add>, %72, %cst [2] : vector<2x8x2xf32> to vector<2x8xf32>
    %74 = vector.shape_cast %73 : vector<2x8xf32> to vector<2x8x1xf32>
    %75 = vector.extract_strided_slice %53 {offsets = [0, 1, 0], sizes = [2, 1, 2], strides = [1, 1, 1]} : vector<2x8x2xf32> to vector<2x1x2xf32>
    %76 = vector.broadcast %75 : vector<2x1x2xf32> to vector<2x8x2xf32>
    %77 = arith.mulf %37, %76 : vector<2x8x2xf32>
    %cst_3 = arith.constant dense<0.000000e+00> : vector<2x8xf32>
    %78 = vector.multi_reduction <add>, %77, %cst_3 [2] : vector<2x8x2xf32> to vector<2x8xf32>
    %79 = vector.shape_cast %78 : vector<2x8xf32> to vector<2x8x1xf32>
    %80 = vector.extract_strided_slice %53 {offsets = [0, 2, 0], sizes = [2, 1, 2], strides = [1, 1, 1]} : vector<2x8x2xf32> to vector<2x1x2xf32>
    %81 = vector.broadcast %80 : vector<2x1x2xf32> to vector<2x8x2xf32>
    %82 = arith.mulf %37, %81 : vector<2x8x2xf32>
    %cst_4 = arith.constant dense<0.000000e+00> : vector<2x8xf32>
    %83 = vector.multi_reduction <add>, %82, %cst_4 [2] : vector<2x8x2xf32> to vector<2x8xf32>
    %84 = vector.shape_cast %83 : vector<2x8xf32> to vector<2x8x1xf32>
    %85 = vector.extract_strided_slice %53 {offsets = [0, 3, 0], sizes = [2, 1, 2], strides = [1, 1, 1]} : vector<2x8x2xf32> to vector<2x1x2xf32>
    %86 = vector.broadcast %85 : vector<2x1x2xf32> to vector<2x8x2xf32>
    %87 = arith.mulf %37, %86 : vector<2x8x2xf32>
    %cst_5 = arith.constant dense<0.000000e+00> : vector<2x8xf32>
    %88 = vector.multi_reduction <add>, %87, %cst_5 [2] : vector<2x8x2xf32> to vector<2x8xf32>
    %89 = vector.shape_cast %88 : vector<2x8xf32> to vector<2x8x1xf32>
    %90 = vector.extract_strided_slice %53 {offsets = [0, 4, 0], sizes = [2, 1, 2], strides = [1, 1, 1]} : vector<2x8x2xf32> to vector<2x1x2xf32>
    %91 = vector.broadcast %90 : vector<2x1x2xf32> to vector<2x8x2xf32>
    %92 = arith.mulf %37, %91 : vector<2x8x2xf32>
    %cst_6 = arith.constant dense<0.000000e+00> : vector<2x8xf32>
    %93 = vector.multi_reduction <add>, %92, %cst_6 [2] : vector<2x8x2xf32> to vector<2x8xf32>
    %94 = vector.shape_cast %93 : vector<2x8xf32> to vector<2x8x1xf32>
    %95 = vector.extract_strided_slice %53 {offsets = [0, 5, 0], sizes = [2, 1, 2], strides = [1, 1, 1]} : vector<2x8x2xf32> to vector<2x1x2xf32>
    %96 = vector.broadcast %95 : vector<2x1x2xf32> to vector<2x8x2xf32>
    %97 = arith.mulf %37, %96 : vector<2x8x2xf32>
    %cst_7 = arith.constant dense<0.000000e+00> : vector<2x8xf32>
    %98 = vector.multi_reduction <add>, %97, %cst_7 [2] : vector<2x8x2xf32> to vector<2x8xf32>
    %99 = vector.shape_cast %98 : vector<2x8xf32> to vector<2x8x1xf32>
    %100 = vector.extract_strided_slice %53 {offsets = [0, 6, 0], sizes = [2, 1, 2], strides = [1, 1, 1]} : vector<2x8x2xf32> to vector<2x1x2xf32>
    %101 = vector.broadcast %100 : vector<2x1x2xf32> to vector<2x8x2xf32>
    %102 = arith.mulf %37, %101 : vector<2x8x2xf32>
    %cst_8 = arith.constant dense<0.000000e+00> : vector<2x8xf32>
    %103 = vector.multi_reduction <add>, %102, %cst_8 [2] : vector<2x8x2xf32> to vector<2x8xf32>
    %104 = vector.shape_cast %103 : vector<2x8xf32> to vector<2x8x1xf32>
    %105 = vector.extract_strided_slice %53 {offsets = [0, 7, 0], sizes = [2, 1, 2], strides = [1, 1, 1]} : vector<2x8x2xf32> to vector<2x1x2xf32>
    %106 = vector.broadcast %105 : vector<2x1x2xf32> to vector<2x8x2xf32>
    %107 = arith.mulf %37, %106 : vector<2x8x2xf32>
    %cst_9 = arith.constant dense<0.000000e+00> : vector<2x8xf32>
    %108 = vector.multi_reduction <add>, %107, %cst_9 [2] : vector<2x8x2xf32> to vector<2x8xf32>
    %109 = vector.shape_cast %108 : vector<2x8xf32> to vector<2x8x1xf32>
    %110 = tpu.concatenate %74, %79, %84, %89, %94, %99, %104, %109 in 2 : vector<2x8x1xf32>, vector<2x8x1xf32>, vector<2x8x1xf32>, vector<2x8x1xf32>, vector<2x8x1xf32>, vector<2x8x1xf32>, vector<2x8x1xf32>, vector<2x8x1xf32> -> vector<2x8x8xf32>
    %cst_10 = arith.constant dense<0xFF800000> : vector<2x8xf32>
    %111 = vector.multi_reduction <maximumf>, %110, %cst_10 [2] : vector<2x8x8xf32> to vector<2x8xf32>
    %112 = vector.shape_cast %111 : vector<2x8xf32> to vector<2x8x1xf32>
    %113 = vector.broadcast %112 : vector<2x8x1xf32> to vector<2x8x8xf32>
    %114 = arith.subf %110, %113 : vector<2x8x8xf32>
    %115 = math.exp %114 : vector<2x8x8xf32>
    %cst_11 = arith.constant dense<0.000000e+00> : vector<2x8xf32>
    %116 = vector.multi_reduction <add>, %115, %cst_11 [2] : vector<2x8x8xf32> to vector<2x8xf32>
    %117 = vector.shape_cast %116 : vector<2x8xf32> to vector<2x8x1xf32>
    %118 = tpu.reciprocal %117 : vector<2x8x1xf32> -> vector<2x8x1xf32>
    %119 = vector.broadcast %118 : vector<2x8x1xf32> to vector<2x8x8xf32>
    %120 = arith.mulf %115, %119 : vector<2x8x8xf32>
    %121 = vector.extract_strided_slice %120 {offsets = [0, 0, 0], sizes = [2, 8, 1], strides = [1, 1, 1]} : vector<2x8x8xf32> to vector<2x8x1xf32>
    %122 = vector.extract_strided_slice %69 {offsets = [0, 0, 0], sizes = [2, 1, 2], strides = [1, 1, 1]} : vector<2x8x2xf32> to vector<2x1x2xf32>
    %123 = vector.broadcast %121 : vector<2x8x1xf32> to vector<2x8x2xf32>
    %124 = vector.broadcast %122 : vector<2x1x2xf32> to vector<2x8x2xf32>
    %125 = arith.mulf %123, %124 : vector<2x8x2xf32>
    %126 = vector.extract_strided_slice %120 {offsets = [0, 0, 1], sizes = [2, 8, 1], strides = [1, 1, 1]} : vector<2x8x8xf32> to vector<2x8x1xf32>
    %127 = vector.extract_strided_slice %69 {offsets = [0, 1, 0], sizes = [2, 1, 2], strides = [1, 1, 1]} : vector<2x8x2xf32> to vector<2x1x2xf32>
    %128 = vector.broadcast %126 : vector<2x8x1xf32> to vector<2x8x2xf32>
    %129 = vector.broadcast %127 : vector<2x1x2xf32> to vector<2x8x2xf32>
    %130 = arith.mulf %128, %129 : vector<2x8x2xf32>
    %131 = arith.addf %125, %130 : vector<2x8x2xf32>
    %132 = vector.extract_strided_slice %120 {offsets = [0, 0, 2], sizes = [2, 8, 1], strides = [1, 1, 1]} : vector<2x8x8xf32> to vector<2x8x1xf32>
    %133 = vector.extract_strided_slice %69 {offsets = [0, 2, 0], sizes = [2, 1, 2], strides = [1, 1, 1]} : vector<2x8x2xf32> to vector<2x1x2xf32>
    %134 = vector.broadcast %132 : vector<2x8x1xf32> to vector<2x8x2xf32>
    %135 = vector.broadcast %133 : vector<2x1x2xf32> to vector<2x8x2xf32>
    %136 = arith.mulf %134, %135 : vector<2x8x2xf32>
    %137 = arith.addf %131, %136 : vector<2x8x2xf32>
    %138 = vector.extract_strided_slice %120 {offsets = [0, 0, 3], sizes = [2, 8, 1], strides = [1, 1, 1]} : vector<2x8x8xf32> to vector<2x8x1xf32>
    %139 = vector.extract_strided_slice %69 {offsets = [0, 3, 0], sizes = [2, 1, 2], strides = [1, 1, 1]} : vector<2x8x2xf32> to vector<2x1x2xf32>
    %140 = vector.broadcast %138 : vector<2x8x1xf32> to vector<2x8x2xf32>
    %141 = vector.broadcast %139 : vector<2x1x2xf32> to vector<2x8x2xf32>
    %142 = arith.mulf %140, %141 : vector<2x8x2xf32>
    %143 = arith.addf %137, %142 : vector<2x8x2xf32>
    %144 = vector.extract_strided_slice %120 {offsets = [0, 0, 4], sizes = [2, 8, 1], strides = [1, 1, 1]} : vector<2x8x8xf32> to vector<2x8x1xf32>
    %145 = vector.extract_strided_slice %69 {offsets = [0, 4, 0], sizes = [2, 1, 2], strides = [1, 1, 1]} : vector<2x8x2xf32> to vector<2x1x2xf32>
    %146 = vector.broadcast %144 : vector<2x8x1xf32> to vector<2x8x2xf32>
    %147 = vector.broadcast %145 : vector<2x1x2xf32> to vector<2x8x2xf32>
    %148 = arith.mulf %146, %147 : vector<2x8x2xf32>
    %149 = arith.addf %143, %148 : vector<2x8x2xf32>
    %150 = vector.extract_strided_slice %120 {offsets = [0, 0, 5], sizes = [2, 8, 1], strides = [1, 1, 1]} : vector<2x8x8xf32> to vector<2x8x1xf32>
    %151 = vector.extract_strided_slice %69 {offsets = [0, 5, 0], sizes = [2, 1, 2], strides = [1, 1, 1]} : vector<2x8x2xf32> to vector<2x1x2xf32>
    %152 = vector.broadcast %150 : vector<2x8x1xf32> to vector<2x8x2xf32>
    %153 = vector.broadcast %151 : vector<2x1x2xf32> to vector<2x8x2xf32>
    %154 = arith.mulf %152, %153 : vector<2x8x2xf32>
    %155 = arith.addf %149, %154 : vector<2x8x2xf32>
    %156 = vector.extract_strided_slice %120 {offsets = [0, 0, 6], sizes = [2, 8, 1], strides = [1, 1, 1]} : vector<2x8x8xf32> to vector<2x8x1xf32>
    %157 = vector.extract_strided_slice %69 {offsets = [0, 6, 0], sizes = [2, 1, 2], strides = [1, 1, 1]} : vector<2x8x2xf32> to vector<2x1x2xf32>
    %158 = vector.broadcast %156 : vector<2x8x1xf32> to vector<2x8x2xf32>
    %159 = vector.broadcast %157 : vector<2x1x2xf32> to vector<2x8x2xf32>
    %160 = arith.mulf %158, %159 : vector<2x8x2xf32>
    %161 = arith.addf %155, %160 : vector<2x8x2xf32>
    %162 = vector.extract_strided_slice %120 {offsets = [0, 0, 7], sizes = [2, 8, 1], strides = [1, 1, 1]} : vector<2x8x8xf32> to vector<2x8x1xf32>
    %163 = vector.extract_strided_slice %69 {offsets = [0, 7, 0], sizes = [2, 1, 2], strides = [1, 1, 1]} : vector<2x8x2xf32> to vector<2x1x2xf32>
    %164 = vector.broadcast %162 : vector<2x8x1xf32> to vector<2x8x2xf32>
    %165 = vector.broadcast %163 : vector<2x1x2xf32> to vector<2x8x2xf32>
    %166 = arith.mulf %164, %165 : vector<2x8x2xf32>
    %167 = arith.addf %161, %166 : vector<2x8x2xf32>
    %168 = vector.extract_strided_slice %167 {offsets = [0, 0, 0], sizes = [2, 8, 1], strides = [1, 1, 1]} : vector<2x8x2xf32> to vector<2x8x1xf32>
    %169 = vector.extract_strided_slice %11 {offsets = [0, 0], sizes = [1, 2], strides = [1, 1]} : vector<2x2xf32> to vector<1x2xf32>
    %170 = vector.shape_cast %169 : vector<1x2xf32> to vector<1x1x2xf32>
    %171 = vector.broadcast %168 : vector<2x8x1xf32> to vector<2x8x2xf32>
    %172 = vector.broadcast %170 : vector<1x1x2xf32> to vector<2x8x2xf32>
    %173 = arith.mulf %171, %172 : vector<2x8x2xf32>
    %174 = vector.extract_strided_slice %167 {offsets = [0, 0, 1], sizes = [2, 8, 1], strides = [1, 1, 1]} : vector<2x8x2xf32> to vector<2x8x1xf32>
    %175 = vector.extract_strided_slice %11 {offsets = [1, 0], sizes = [1, 2], strides = [1, 1]} : vector<2x2xf32> to vector<1x2xf32>
    %176 = vector.shape_cast %175 : vector<1x2xf32> to vector<1x1x2xf32>
    %177 = vector.broadcast %174 : vector<2x8x1xf32> to vector<2x8x2xf32>
    %178 = vector.broadcast %176 : vector<1x1x2xf32> to vector<2x8x2xf32>
    %179 = arith.mulf %177, %178 : vector<2x8x2xf32>
    %180 = arith.addf %173, %179 : vector<2x8x2xf32>
    %181 = vector.shape_cast %18 : vector<1x2xf32> to vector<1x1x2xf32>
    %182 = vector.broadcast %181 : vector<1x1x2xf32> to vector<2x8x2xf32>
    %183 = arith.addf %180, %182 : vector<2x8x2xf32>
    %184 = vector.extract_strided_slice %183 {offsets = [0, 0, 0], sizes = [2, 8, 1], strides = [1, 1, 1]} : vector<2x8x2xf32> to vector<2x8x1xf32>
    %185 = vector.extract_strided_slice %8 {offsets = [0, 0], sizes = [1, 2], strides = [1, 1]} : vector<2x2xf32> to vector<1x2xf32>
    %186 = vector.shape_cast %185 : vector<1x2xf32> to vector<1x1x2xf32>
    %187 = vector.broadcast %184 : vector<2x8x1xf32> to vector<2x8x2xf32>
    %188 = vector.broadcast %186 : vector<1x1x2xf32> to vector<2x8x2xf32>
    %189 = arith.mulf %187, %188 : vector<2x8x2xf32>
    %190 = vector.extract_strided_slice %183 {offsets = [0, 0, 1], sizes = [2, 8, 1], strides = [1, 1, 1]} : vector<2x8x2xf32> to vector<2x8x1xf32>
    %191 = vector.extract_strided_slice %8 {offsets = [1, 0], sizes = [1, 2], strides = [1, 1]} : vector<2x2xf32> to vector<1x2xf32>
    %192 = vector.shape_cast %191 : vector<1x2xf32> to vector<1x1x2xf32>
    %193 = vector.broadcast %190 : vector<2x8x1xf32> to vector<2x8x2xf32>
    %194 = vector.broadcast %192 : vector<1x1x2xf32> to vector<2x8x2xf32>
    %195 = arith.mulf %193, %194 : vector<2x8x2xf32>
    %196 = arith.addf %189, %195 : vector<2x8x2xf32>
    %197 = vector.shape_cast %15 : vector<1x2xf32> to vector<1x1x2xf32>
    %198 = vector.broadcast %197 : vector<1x1x2xf32> to vector<2x8x2xf32>
    %199 = arith.addf %196, %198 : vector<2x8x2xf32>
    %200 = vector.extract_strided_slice %5 {offsets = [0, 0, 0], sizes = [2, 8, 1], strides = [1, 1, 1]} : vector<2x8x2xf32> to vector<2x8x1xf32>
    %201 = vector.extract_strided_slice %9 {offsets = [0, 0], sizes = [1, 2], strides = [1, 1]} : vector<2x2xf32> to vector<1x2xf32>
    %202 = vector.shape_cast %201 : vector<1x2xf32> to vector<1x1x2xf32>
    %203 = vector.broadcast %200 : vector<2x8x1xf32> to vector<2x8x2xf32>
    %204 = vector.broadcast %202 : vector<1x1x2xf32> to vector<2x8x2xf32>
    %205 = arith.mulf %203, %204 : vector<2x8x2xf32>
    %206 = vector.extract_strided_slice %5 {offsets = [0, 0, 1], sizes = [2, 8, 1], strides = [1, 1, 1]} : vector<2x8x2xf32> to vector<2x8x1xf32>
    %207 = vector.extract_strided_slice %9 {offsets = [1, 0], sizes = [1, 2], strides = [1, 1]} : vector<2x2xf32> to vector<1x2xf32>
    %208 = vector.shape_cast %207 : vector<1x2xf32> to vector<1x1x2xf32>
    %209 = vector.broadcast %206 : vector<2x8x1xf32> to vector<2x8x2xf32>
    %210 = vector.broadcast %208 : vector<1x1x2xf32> to vector<2x8x2xf32>
    %211 = arith.mulf %209, %210 : vector<2x8x2xf32>
    %212 = arith.addf %205, %211 : vector<2x8x2xf32>
    %213 = vector.shape_cast %16 : vector<1x2xf32> to vector<1x1x2xf32>
    %214 = vector.broadcast %213 : vector<1x1x2xf32> to vector<2x8x2xf32>
    %215 = arith.addf %212, %214 : vector<2x8x2xf32>
    %216 = vector.extract_strided_slice %5 {offsets = [0, 0, 0], sizes = [2, 8, 1], strides = [1, 1, 1]} : vector<2x8x2xf32> to vector<2x8x1xf32>
    %217 = vector.extract_strided_slice %10 {offsets = [0, 0], sizes = [1, 2], strides = [1, 1]} : vector<2x2xf32> to vector<1x2xf32>
    %218 = vector.shape_cast %217 : vector<1x2xf32> to vector<1x1x2xf32>
    %219 = vector.broadcast %216 : vector<2x8x1xf32> to vector<2x8x2xf32>
    %220 = vector.broadcast %218 : vector<1x1x2xf32> to vector<2x8x2xf32>
    %221 = arith.mulf %219, %220 : vector<2x8x2xf32>
    %222 = vector.extract_strided_slice %5 {offsets = [0, 0, 1], sizes = [2, 8, 1], strides = [1, 1, 1]} : vector<2x8x2xf32> to vector<2x8x1xf32>
    %223 = vector.extract_strided_slice %10 {offsets = [1, 0], sizes = [1, 2], strides = [1, 1]} : vector<2x2xf32> to vector<1x2xf32>
    %224 = vector.shape_cast %223 : vector<1x2xf32> to vector<1x1x2xf32>
    %225 = vector.broadcast %222 : vector<2x8x1xf32> to vector<2x8x2xf32>
    %226 = vector.broadcast %224 : vector<1x1x2xf32> to vector<2x8x2xf32>
    %227 = arith.mulf %225, %226 : vector<2x8x2xf32>
    %228 = arith.addf %221, %227 : vector<2x8x2xf32>
    %229 = vector.shape_cast %17 : vector<1x2xf32> to vector<1x1x2xf32>
    %230 = vector.broadcast %229 : vector<1x1x2xf32> to vector<2x8x2xf32>
    %231 = arith.addf %228, %230 : vector<2x8x2xf32>
    %232 = vector.extract_strided_slice %215 {offsets = [0, 0, 0], sizes = [2, 1, 2], strides = [1, 1, 1]} : vector<2x8x2xf32> to vector<2x1x2xf32>
    %233 = vector.broadcast %232 : vector<2x1x2xf32> to vector<2x8x2xf32>
    %234 = arith.mulf %199, %233 : vector<2x8x2xf32>
    %cst_12 = arith.constant dense<0.000000e+00> : vector<2x8xf32>
    %235 = vector.multi_reduction <add>, %234, %cst_12 [2] : vector<2x8x2xf32> to vector<2x8xf32>
    %236 = vector.shape_cast %235 : vector<2x8xf32> to vector<2x8x1xf32>
    %237 = vector.extract_strided_slice %215 {offsets = [0, 1, 0], sizes = [2, 1, 2], strides = [1, 1, 1]} : vector<2x8x2xf32> to vector<2x1x2xf32>
    %238 = vector.broadcast %237 : vector<2x1x2xf32> to vector<2x8x2xf32>
    %239 = arith.mulf %199, %238 : vector<2x8x2xf32>
    %cst_13 = arith.constant dense<0.000000e+00> : vector<2x8xf32>
    %240 = vector.multi_reduction <add>, %239, %cst_13 [2] : vector<2x8x2xf32> to vector<2x8xf32>
    %241 = vector.shape_cast %240 : vector<2x8xf32> to vector<2x8x1xf32>
    %242 = vector.extract_strided_slice %215 {offsets = [0, 2, 0], sizes = [2, 1, 2], strides = [1, 1, 1]} : vector<2x8x2xf32> to vector<2x1x2xf32>
    %243 = vector.broadcast %242 : vector<2x1x2xf32> to vector<2x8x2xf32>
    %244 = arith.mulf %199, %243 : vector<2x8x2xf32>
    %cst_14 = arith.constant dense<0.000000e+00> : vector<2x8xf32>
    %245 = vector.multi_reduction <add>, %244, %cst_14 [2] : vector<2x8x2xf32> to vector<2x8xf32>
    %246 = vector.shape_cast %245 : vector<2x8xf32> to vector<2x8x1xf32>
    %247 = vector.extract_strided_slice %215 {offsets = [0, 3, 0], sizes = [2, 1, 2], strides = [1, 1, 1]} : vector<2x8x2xf32> to vector<2x1x2xf32>
    %248 = vector.broadcast %247 : vector<2x1x2xf32> to vector<2x8x2xf32>
    %249 = arith.mulf %199, %248 : vector<2x8x2xf32>
    %cst_15 = arith.constant dense<0.000000e+00> : vector<2x8xf32>
    %250 = vector.multi_reduction <add>, %249, %cst_15 [2] : vector<2x8x2xf32> to vector<2x8xf32>
    %251 = vector.shape_cast %250 : vector<2x8xf32> to vector<2x8x1xf32>
    %252 = vector.extract_strided_slice %215 {offsets = [0, 4, 0], sizes = [2, 1, 2], strides = [1, 1, 1]} : vector<2x8x2xf32> to vector<2x1x2xf32>
    %253 = vector.broadcast %252 : vector<2x1x2xf32> to vector<2x8x2xf32>
    %254 = arith.mulf %199, %253 : vector<2x8x2xf32>
    %cst_16 = arith.constant dense<0.000000e+00> : vector<2x8xf32>
    %255 = vector.multi_reduction <add>, %254, %cst_16 [2] : vector<2x8x2xf32> to vector<2x8xf32>
    %256 = vector.shape_cast %255 : vector<2x8xf32> to vector<2x8x1xf32>
    %257 = vector.extract_strided_slice %215 {offsets = [0, 5, 0], sizes = [2, 1, 2], strides = [1, 1, 1]} : vector<2x8x2xf32> to vector<2x1x2xf32>
    %258 = vector.broadcast %257 : vector<2x1x2xf32> to vector<2x8x2xf32>
    %259 = arith.mulf %199, %258 : vector<2x8x2xf32>
    %cst_17 = arith.constant dense<0.000000e+00> : vector<2x8xf32>
    %260 = vector.multi_reduction <add>, %259, %cst_17 [2] : vector<2x8x2xf32> to vector<2x8xf32>
    %261 = vector.shape_cast %260 : vector<2x8xf32> to vector<2x8x1xf32>
    %262 = vector.extract_strided_slice %215 {offsets = [0, 6, 0], sizes = [2, 1, 2], strides = [1, 1, 1]} : vector<2x8x2xf32> to vector<2x1x2xf32>
    %263 = vector.broadcast %262 : vector<2x1x2xf32> to vector<2x8x2xf32>
    %264 = arith.mulf %199, %263 : vector<2x8x2xf32>
    %cst_18 = arith.constant dense<0.000000e+00> : vector<2x8xf32>
    %265 = vector.multi_reduction <add>, %264, %cst_18 [2] : vector<2x8x2xf32> to vector<2x8xf32>
    %266 = vector.shape_cast %265 : vector<2x8xf32> to vector<2x8x1xf32>
    %267 = vector.extract_strided_slice %215 {offsets = [0, 7, 0], sizes = [2, 1, 2], strides = [1, 1, 1]} : vector<2x8x2xf32> to vector<2x1x2xf32>
    %268 = vector.broadcast %267 : vector<2x1x2xf32> to vector<2x8x2xf32>
    %269 = arith.mulf %199, %268 : vector<2x8x2xf32>
    %cst_19 = arith.constant dense<0.000000e+00> : vector<2x8xf32>
    %270 = vector.multi_reduction <add>, %269, %cst_19 [2] : vector<2x8x2xf32> to vector<2x8xf32>
    %271 = vector.shape_cast %270 : vector<2x8xf32> to vector<2x8x1xf32>
    %272 = tpu.concatenate %236, %241, %246, %251, %256, %261, %266, %271 in 2 : vector<2x8x1xf32>, vector<2x8x1xf32>, vector<2x8x1xf32>, vector<2x8x1xf32>, vector<2x8x1xf32>, vector<2x8x1xf32>, vector<2x8x1xf32>, vector<2x8x1xf32> -> vector<2x8x8xf32>
    %cst_20 = arith.constant dense<0xFF800000> : vector<2x8xf32>
    %273 = vector.multi_reduction <maximumf>, %272, %cst_20 [2] : vector<2x8x8xf32> to vector<2x8xf32>
    %274 = vector.shape_cast %273 : vector<2x8xf32> to vector<2x8x1xf32>
    %275 = vector.broadcast %274 : vector<2x8x1xf32> to vector<2x8x8xf32>
    %276 = arith.subf %272, %275 : vector<2x8x8xf32>
    %277 = math.exp %276 : vector<2x8x8xf32>
    %cst_21 = arith.constant dense<0.000000e+00> : vector<2x8xf32>
    %278 = vector.multi_reduction <add>, %277, %cst_21 [2] : vector<2x8x8xf32> to vector<2x8xf32>
    %279 = vector.shape_cast %278 : vector<2x8xf32> to vector<2x8x1xf32>
    %280 = tpu.reciprocal %279 : vector<2x8x1xf32> -> vector<2x8x1xf32>
    %281 = vector.broadcast %280 : vector<2x8x1xf32> to vector<2x8x8xf32>
    %282 = arith.mulf %277, %281 : vector<2x8x8xf32>
    %283 = vector.extract_strided_slice %282 {offsets = [0, 0, 0], sizes = [2, 8, 1], strides = [1, 1, 1]} : vector<2x8x8xf32> to vector<2x8x1xf32>
    %284 = vector.extract_strided_slice %231 {offsets = [0, 0, 0], sizes = [2, 1, 2], strides = [1, 1, 1]} : vector<2x8x2xf32> to vector<2x1x2xf32>
    %285 = vector.broadcast %283 : vector<2x8x1xf32> to vector<2x8x2xf32>
    %286 = vector.broadcast %284 : vector<2x1x2xf32> to vector<2x8x2xf32>
    %287 = arith.mulf %285, %286 : vector<2x8x2xf32>
    %288 = vector.extract_strided_slice %282 {offsets = [0, 0, 1], sizes = [2, 8, 1], strides = [1, 1, 1]} : vector<2x8x8xf32> to vector<2x8x1xf32>
    %289 = vector.extract_strided_slice %231 {offsets = [0, 1, 0], sizes = [2, 1, 2], strides = [1, 1, 1]} : vector<2x8x2xf32> to vector<2x1x2xf32>
    %290 = vector.broadcast %288 : vector<2x8x1xf32> to vector<2x8x2xf32>
    %291 = vector.broadcast %289 : vector<2x1x2xf32> to vector<2x8x2xf32>
    %292 = arith.mulf %290, %291 : vector<2x8x2xf32>
    %293 = arith.addf %287, %292 : vector<2x8x2xf32>
    %294 = vector.extract_strided_slice %282 {offsets = [0, 0, 2], sizes = [2, 8, 1], strides = [1, 1, 1]} : vector<2x8x8xf32> to vector<2x8x1xf32>
    %295 = vector.extract_strided_slice %231 {offsets = [0, 2, 0], sizes = [2, 1, 2], strides = [1, 1, 1]} : vector<2x8x2xf32> to vector<2x1x2xf32>
    %296 = vector.broadcast %294 : vector<2x8x1xf32> to vector<2x8x2xf32>
    %297 = vector.broadcast %295 : vector<2x1x2xf32> to vector<2x8x2xf32>
    %298 = arith.mulf %296, %297 : vector<2x8x2xf32>
    %299 = arith.addf %293, %298 : vector<2x8x2xf32>
    %300 = vector.extract_strided_slice %282 {offsets = [0, 0, 3], sizes = [2, 8, 1], strides = [1, 1, 1]} : vector<2x8x8xf32> to vector<2x8x1xf32>
    %301 = vector.extract_strided_slice %231 {offsets = [0, 3, 0], sizes = [2, 1, 2], strides = [1, 1, 1]} : vector<2x8x2xf32> to vector<2x1x2xf32>
    %302 = vector.broadcast %300 : vector<2x8x1xf32> to vector<2x8x2xf32>
    %303 = vector.broadcast %301 : vector<2x1x2xf32> to vector<2x8x2xf32>
    %304 = arith.mulf %302, %303 : vector<2x8x2xf32>
    %305 = arith.addf %299, %304 : vector<2x8x2xf32>
    %306 = vector.extract_strided_slice %282 {offsets = [0, 0, 4], sizes = [2, 8, 1], strides = [1, 1, 1]} : vector<2x8x8xf32> to vector<2x8x1xf32>
    %307 = vector.extract_strided_slice %231 {offsets = [0, 4, 0], sizes = [2, 1, 2], strides = [1, 1, 1]} : vector<2x8x2xf32> to vector<2x1x2xf32>
    %308 = vector.broadcast %306 : vector<2x8x1xf32> to vector<2x8x2xf32>
    %309 = vector.broadcast %307 : vector<2x1x2xf32> to vector<2x8x2xf32>
    %310 = arith.mulf %308, %309 : vector<2x8x2xf32>
    %311 = arith.addf %305, %310 : vector<2x8x2xf32>
    %312 = vector.extract_strided_slice %282 {offsets = [0, 0, 5], sizes = [2, 8, 1], strides = [1, 1, 1]} : vector<2x8x8xf32> to vector<2x8x1xf32>
    %313 = vector.extract_strided_slice %231 {offsets = [0, 5, 0], sizes = [2, 1, 2], strides = [1, 1, 1]} : vector<2x8x2xf32> to vector<2x1x2xf32>
    %314 = vector.broadcast %312 : vector<2x8x1xf32> to vector<2x8x2xf32>
    %315 = vector.broadcast %313 : vector<2x1x2xf32> to vector<2x8x2xf32>
    %316 = arith.mulf %314, %315 : vector<2x8x2xf32>
    %317 = arith.addf %311, %316 : vector<2x8x2xf32>
    %318 = vector.extract_strided_slice %282 {offsets = [0, 0, 6], sizes = [2, 8, 1], strides = [1, 1, 1]} : vector<2x8x8xf32> to vector<2x8x1xf32>
    %319 = vector.extract_strided_slice %231 {offsets = [0, 6, 0], sizes = [2, 1, 2], strides = [1, 1, 1]} : vector<2x8x2xf32> to vector<2x1x2xf32>
    %320 = vector.broadcast %318 : vector<2x8x1xf32> to vector<2x8x2xf32>
    %321 = vector.broadcast %319 : vector<2x1x2xf32> to vector<2x8x2xf32>
    %322 = arith.mulf %320, %321 : vector<2x8x2xf32>
    %323 = arith.addf %317, %322 : vector<2x8x2xf32>
    %324 = vector.extract_strided_slice %282 {offsets = [0, 0, 7], sizes = [2, 8, 1], strides = [1, 1, 1]} : vector<2x8x8xf32> to vector<2x8x1xf32>
    %325 = vector.extract_strided_slice %231 {offsets = [0, 7, 0], sizes = [2, 1, 2], strides = [1, 1, 1]} : vector<2x8x2xf32> to vector<2x1x2xf32>
    %326 = vector.broadcast %324 : vector<2x8x1xf32> to vector<2x8x2xf32>
    %327 = vector.broadcast %325 : vector<2x1x2xf32> to vector<2x8x2xf32>
    %328 = arith.mulf %326, %327 : vector<2x8x2xf32>
    %329 = arith.addf %323, %328 : vector<2x8x2xf32>
    %330 = vector.extract_strided_slice %329 {offsets = [0, 0, 0], sizes = [2, 8, 1], strides = [1, 1, 1]} : vector<2x8x2xf32> to vector<2x8x1xf32>
    %331 = vector.extract_strided_slice %12 {offsets = [0, 0], sizes = [1, 2], strides = [1, 1]} : vector<2x2xf32> to vector<1x2xf32>
    %332 = vector.shape_cast %331 : vector<1x2xf32> to vector<1x1x2xf32>
    %333 = vector.broadcast %330 : vector<2x8x1xf32> to vector<2x8x2xf32>
    %334 = vector.broadcast %332 : vector<1x1x2xf32> to vector<2x8x2xf32>
    %335 = arith.mulf %333, %334 : vector<2x8x2xf32>
    %336 = vector.extract_strided_slice %329 {offsets = [0, 0, 1], sizes = [2, 8, 1], strides = [1, 1, 1]} : vector<2x8x2xf32> to vector<2x8x1xf32>
    %337 = vector.extract_strided_slice %12 {offsets = [1, 0], sizes = [1, 2], strides = [1, 1]} : vector<2x2xf32> to vector<1x2xf32>
    %338 = vector.shape_cast %337 : vector<1x2xf32> to vector<1x1x2xf32>
    %339 = vector.broadcast %336 : vector<2x8x1xf32> to vector<2x8x2xf32>
    %340 = vector.broadcast %338 : vector<1x1x2xf32> to vector<2x8x2xf32>
    %341 = arith.mulf %339, %340 : vector<2x8x2xf32>
    %342 = arith.addf %335, %341 : vector<2x8x2xf32>
    %343 = vector.shape_cast %19 : vector<1x2xf32> to vector<1x1x2xf32>
    %344 = vector.broadcast %343 : vector<1x1x2xf32> to vector<2x8x2xf32>
    %345 = arith.addf %342, %344 : vector<2x8x2xf32>
    %346 = vector.extract_strided_slice %345 {offsets = [0, 0, 0], sizes = [2, 8, 1], strides = [1, 1, 1]} : vector<2x8x2xf32> to vector<2x8x1xf32>
    %347 = vector.extract_strided_slice %13 {offsets = [0, 0], sizes = [1, 8], strides = [1, 1]} : vector<2x8xf32> to vector<1x8xf32>
    %348 = vector.shape_cast %347 : vector<1x8xf32> to vector<1x1x8xf32>
    %349 = vector.broadcast %346 : vector<2x8x1xf32> to vector<2x8x8xf32>
    %350 = vector.broadcast %348 : vector<1x1x8xf32> to vector<2x8x8xf32>
    %351 = arith.mulf %349, %350 : vector<2x8x8xf32>
    %352 = vector.extract_strided_slice %345 {offsets = [0, 0, 1], sizes = [2, 8, 1], strides = [1, 1, 1]} : vector<2x8x2xf32> to vector<2x8x1xf32>
    %353 = vector.extract_strided_slice %13 {offsets = [1, 0], sizes = [1, 8], strides = [1, 1]} : vector<2x8xf32> to vector<1x8xf32>
    %354 = vector.shape_cast %353 : vector<1x8xf32> to vector<1x1x8xf32>
    %355 = vector.broadcast %352 : vector<2x8x1xf32> to vector<2x8x8xf32>
    %356 = vector.broadcast %354 : vector<1x1x8xf32> to vector<2x8x8xf32>
    %357 = arith.mulf %355, %356 : vector<2x8x8xf32>
    %358 = arith.addf %351, %357 : vector<2x8x8xf32>
    %359 = vector.shape_cast %20 : vector<1x8xf32> to vector<1x1x8xf32>
    %360 = vector.broadcast %359 : vector<1x1x8xf32> to vector<2x8x8xf32>
    %361 = arith.addf %358, %360 : vector<2x8x8xf32>
    %cst_22 = arith.constant 0.000000e+00 : f32
    %362 = vector.broadcast %cst_22 : f32 to vector<2x8x8xf32>
    %363 = arith.maximumf %361, %362 : vector<2x8x8xf32>
    %364 = vector.extract_strided_slice %14 {offsets = [0, 0], sizes = [1, 8], strides = [1, 1]} : vector<2x8xf32> to vector<1x8xf32>
    %365 = vector.shape_cast %364 : vector<1x8xf32> to vector<1x1x8xf32>
    %366 = vector.broadcast %365 : vector<1x1x8xf32> to vector<2x8x8xf32>
    %367 = arith.mulf %363, %366 : vector<2x8x8xf32>
    %cst_23 = arith.constant dense<0.000000e+00> : vector<2x8xf32>
    %368 = vector.multi_reduction <add>, %367, %cst_23 [2] : vector<2x8x8xf32> to vector<2x8xf32>
    %369 = vector.shape_cast %368 : vector<2x8xf32> to vector<2x8x1xf32>
    %370 = vector.extract_strided_slice %14 {offsets = [1, 0], sizes = [1, 8], strides = [1, 1]} : vector<2x8xf32> to vector<1x8xf32>
    %371 = vector.shape_cast %370 : vector<1x8xf32> to vector<1x1x8xf32>
    %372 = vector.broadcast %371 : vector<1x1x8xf32> to vector<2x8x8xf32>
    %373 = arith.mulf %363, %372 : vector<2x8x8xf32>
    %cst_24 = arith.constant dense<0.000000e+00> : vector<2x8xf32>
    %374 = vector.multi_reduction <add>, %373, %cst_24 [2] : vector<2x8x8xf32> to vector<2x8xf32>
    %375 = vector.shape_cast %374 : vector<2x8xf32> to vector<2x8x1xf32>
    %376 = tpu.concatenate %369, %375 in 2 : vector<2x8x1xf32>, vector<2x8x1xf32> -> vector<2x8x2xf32>
    %377 = vector.shape_cast %21 : vector<1x2xf32> to vector<1x1x2xf32>
    %378 = vector.broadcast %377 : vector<1x1x2xf32> to vector<2x8x2xf32>
    %379 = arith.addf %376, %378 : vector<2x8x2xf32>
    %380 = vector.shape_cast %379 : vector<2x8x2xf32> to vector<16x2xf32>
    %c0_25 = arith.constant 0 : index
    %c0_26 = arith.constant 0 : index
    %381 = vector.load %arg2[%c0_25, %c0_26] : memref<16x2xf32, #tpu.memory_space<vmem>>, vector<16x2xf32>
    tpu.vector_store %arg2[%c0_25, %c0_26], %380 {strides = array<i32>} : memref<16x2xf32, #tpu.memory_space<vmem>>, vector<16x2xf32>,
    return
  }
}

</mosaic_0001>

<llo_original>
// kernel: tpu_custom_call.1
$region0: #{tpu_custom_call.1}
  #allocation0 [shape = 'u32[]', space=smem, size = 0x4, offset = 0x4, fixed_abs, tag = 'smem constant byte address 0x4 - core index']
  #allocation1 [shape = 'u32[144,128]{1,0:T(1,128)}', space=vmem, size = 0x12000, scoped, tag = 'internal scratch']
  %s0 = inlined_call_operand.vmem [shape: f32[32,2], index: 0, kind: input, shape index: {}]
  %s1 = inlined_call_operand.vmem [shape: f32[3,26], index: 1, kind: input, shape index: {}]
  %s2 = inlined_call_operand.vmem [shape: f32[16,2], index: 2, kind: output, shape index: {}]
  %s3 = sld [smem:[#allocation0]]
  $region18: #{tpu_custom_call.1} parent=0
    _
  %s5 = ssub.s32 1, %s3
  %s6 = scalar_select 0, %s5, %s3
  // Predicated region
  $region2: #{tpu_custom_call.1} parent=0 // pred_check
    _
  $region3: #{tpu_custom_call.1} parent=0 // pred_check_branch
    %8 = sbr.rel (0) target = $region5
  $region4: #{tpu_custom_call.1} parent=0 // pred_region
    _
  $region5: #{tpu_custom_call.1} parent=0 // pred_fallthru
    _
  // Predicated region
  $region6: #{tpu_custom_call.1} parent=0 // pred_check
    _
  $region7: #{tpu_custom_call.1} parent=0 // pred_check_branch
    %10 = sbr.rel (0) target = $region9
  $region8: #{tpu_custom_call.1} parent=0 // pred_region
    _
  $region9: #{tpu_custom_call.1} parent=0 // pred_fallthru
    _
  %v11 = vld [vmem:[%s0] sm:$0xff]
  %v12 = vld [vmem:[%s0 + $0x8] sm:$0xff]
  %v13 = vld [vmem:[%s0 + $0x10] sm:$0xff]
  %v14 = vld [vmem:[%s0 + $0x18] sm:$0xff]
  %v15 = vld [vmem:[%s1] sm:$0x7]
  %17 = vset.pattern.permute.xlu0 0
  %18 = vperm.xlu0 %17, %v11
  %v19 = vpop.permute.xlu0 %18
  %22 = vset.pattern.permute.xlu0 0
  %23 = vperm.xlu0 %22, %v12
  %v24 = vpop.permute.xlu0 %23
  %v26 = vlaneseq
  %v27 = vshrl.u32 %v26, 7
  %v28 = vsub.s32 0, %v27
  %v29 = vrot.slane %v15, %v28
  %v30 = vmul.f32 %v19, %v29
  %v31 = vmul.f32 %v24, %v29
  %32 = vset.pattern.permute.xlu0 1
  %33 = vperm.xlu0 %32, %v11
  %v34 = vpop.permute.xlu0 %33
  %36 = vset.pattern.permute.xlu0 1
  %37 = vperm.xlu0 %36, %v12
  %v38 = vpop.permute.xlu0 %37
  %v40 = vlaneseq
  %v41 = vshrl.u32 %v40, 7
  %v42 = vsub.s32 1, %v41
  %v43 = vrot.slane %v15, %v42
  %v44 = vmul.f32 %v34, %v43
  %v45 = vmul.f32 %v38, %v43
  %v46 = vadd.f32 %v30, %v44
  %v47 = vadd.f32 %v31, %v45
  %v48 = vlaneseq
  %v49 = vshrl.u32 %v48, 7
  %v50 = vsub.s32 2, %v49
  %v51 = vrot.slane %v15, %v50
  %v52 = vadd.f32 %v46, %v51
  %v53 = vadd.f32 %v47, %v51
  %v54 = vlaneseq
  %v55 = vshrl.u32 %v54, 7
  %v56 = vsub.s32 0, %v55
  %v57 = vrot.slane %v52, %v56
  %v58 = vlaneseq
  %v59 = vshrl.u32 %v58, 7
  %v60 = vsub.s32 0, %v59
  %v61 = vrot.slane %v53, %v60
  %64 = vrot.lane.b32.xlu0 %v57, 126
  %v65 = vpop.permute.xlu0 %64
  %66 = vrot.lane.b32.xlu0 %v61, 126
  %v67 = vpop.permute.xlu0 %66
  %v70 = vmul.f32 %v52, %v65
  %v71 = vmul.f32 %v53, %v67
  %vm72 = vcmask 15360
  %v73 = vsel %vm72, %v70, 0.0
  %74 = vadd.xlane.f32.xlu0 %v73
  %v75 = vpop.xlane.xlu0 %74
  %v76 = vsel %vm72, %v71, 0.0
  %77 = vadd.xlane.f32.xlu0 %v76
  %v78 = vpop.xlane.xlu0 %77
  %v79 = vlaneseq
  %v80 = vshrl.u32 %v79, 7
  %v81 = vsub.s32 1, %v80
  %v82 = vrot.slane %v52, %v81
  %v83 = vlaneseq
  %v84 = vshrl.u32 %v83, 7
  %v85 = vsub.s32 1, %v84
  %v86 = vrot.slane %v53, %v85
  %89 = vrot.lane.b32.xlu0 %v82, 126
  %v90 = vpop.permute.xlu0 %89
  %91 = vrot.lane.b32.xlu0 %v86, 126
  %v92 = vpop.permute.xlu0 %91
  %v95 = vmul.f32 %v52, %v90
  %v96 = vmul.f32 %v53, %v92
  %v97 = vsel %vm72, %v95, 0.0
  %98 = vadd.xlane.f32.xlu0 %v97
  %v99 = vpop.xlane.xlu0 %98
  %v100 = vsel %vm72, %v96, 0.0
  %101 = vadd.xlane.f32.xlu0 %v100
  %v102 = vpop.xlane.xlu0 %101
  %v103 = vlaneseq
  %v104 = vshrl.u32 %v103, 7
  %v105 = vsub.s32 2, %v104
  %v106 = vrot.slane %v52, %v105
  %v107 = vlaneseq
  %v108 = vshrl.u32 %v107, 7
  %v109 = vsub.s32 2, %v108
  %v110 = vrot.slane %v53, %v109
  %113 = vrot.lane.b32.xlu0 %v106, 126
  %v114 = vpop.permute.xlu0 %113
  %115 = vrot.lane.b32.xlu0 %v110, 126
  %v116 = vpop.permute.xlu0 %115
  %v119 = vmul.f32 %v52, %v114
  %v120 = vmul.f32 %v53, %v116
  %v121 = vsel %vm72, %v119, 0.0
  %122 = vadd.xlane.f32.xlu0 %v121
  %v123 = vpop.xlane.xlu0 %122
  %v124 = vsel %vm72, %v120, 0.0
  %125 = vadd.xlane.f32.xlu0 %v124
  %v126 = vpop.xlane.xlu0 %125
  %v127 = vlaneseq
  %v128 = vshrl.u32 %v127, 7
  %v129 = vsub.s32 3, %v128
  %v130 = vrot.slane %v52, %v129
  %v131 = vlaneseq
  %v132 = vshrl.u32 %v131, 7
  %v133 = vsub.s32 3, %v132
  %v134 = vrot.slane %v53, %v133
  %137 = vrot.lane.b32.xlu0 %v130, 126
  %v138 = vpop.permute.xlu0 %137
  %139 = vrot.lane.b32.xlu0 %v134, 126
  %v140 = vpop.permute.xlu0 %139
  %v143 = vmul.f32 %v52, %v138
  %v144 = vmul.f32 %v53, %v140
  %v145 = vsel %vm72, %v143, 0.0
  %146 = vadd.xlane.f32.xlu0 %v145
  %v147 = vpop.xlane.xlu0 %146
  %v148 = vsel %vm72, %v144, 0.0
  %149 = vadd.xlane.f32.xlu0 %v148
  %v150 = vpop.xlane.xlu0 %149
  %v151 = vlaneseq
  %v152 = vshrl.u32 %v151, 7
  %v153 = vsub.s32 4, %v152
  %v154 = vrot.slane %v52, %v153
  %v155 = vlaneseq
  %v156 = vshrl.u32 %v155, 7
  %v157 = vsub.s32 4, %v156
  %v158 = vrot.slane %v53, %v157
  %161 = vrot.lane.b32.xlu0 %v154, 126
  %v162 = vpop.permute.xlu0 %161
  %163 = vrot.lane.b32.xlu0 %v158, 126
  %v164 = vpop.permute.xlu0 %163
  %v167 = vmul.f32 %v52, %v162
  %v168 = vmul.f32 %v53, %v164
  %v169 = vsel %vm72, %v167, 0.0
  %170 = vadd.xlane.f32.xlu0 %v169
  %v171 = vpop.xlane.xlu0 %170
  %v172 = vsel %vm72, %v168, 0.0
  %173 = vadd.xlane.f32.xlu0 %v172
  %v174 = vpop.xlane.xlu0 %173
  %v175 = vlaneseq
  %v176 = vshrl.u32 %v175, 7
  %v177 = vsub.s32 5, %v176
  %v178 = vrot.slane %v52, %v177
  %v179 = vlaneseq
  %v180 = vshrl.u32 %v179, 7
  %v181 = vsub.s32 5, %v180
  %v182 = vrot.slane %v53, %v181
  %185 = vrot.lane.b32.xlu0 %v178, 126
  %v186 = vpop.permute.xlu0 %185
  %187 = vrot.lane.b32.xlu0 %v182, 126
  %v188 = vpop.permute.xlu0 %187
  %v191 = vmul.f32 %v52, %v186
  %v192 = vmul.f32 %v53, %v188
  %v193 = vsel %vm72, %v191, 0.0
  %194 = vadd.xlane.f32.xlu0 %v193
  %v195 = vpop.xlane.xlu0 %194
  %v196 = vsel %vm72, %v192, 0.0
  %197 = vadd.xlane.f32.xlu0 %v196
  %v198 = vpop.xlane.xlu0 %197
  %v199 = vlaneseq
  %v200 = vshrl.u32 %v199, 7
  %v201 = vsub.s32 6, %v200
  %v202 = vrot.slane %v52, %v201
  %v203 = vlaneseq
  %v204 = vshrl.u32 %v203, 7
  %v205 = vsub.s32 6, %v204
  %v206 = vrot.slane %v53, %v205
  %209 = vrot.lane.b32.xlu0 %v202, 126
  %v210 = vpop.permute.xlu0 %209
  %211 = vrot.lane.b32.xlu0 %v206, 126
  %v212 = vpop.permute.xlu0 %211
  %v215 = vmul.f32 %v52, %v210
  %v216 = vmul.f32 %v53, %v212
  %v217 = vsel %vm72, %v215, 0.0
  %218 = vadd.xlane.f32.xlu0 %v217
  %v219 = vpop.xlane.xlu0 %218
  %v220 = vsel %vm72, %v216, 0.0
  %221 = vadd.xlane.f32.xlu0 %v220
  %v222 = vpop.xlane.xlu0 %221
  %v223 = vlaneseq
  %v224 = vshrl.u32 %v223, 7
  %v225 = vsub.s32 7, %v224
  %v226 = vrot.slane %v52, %v225
  %v227 = vlaneseq
  %v228 = vshrl.u32 %v227, 7
  %v229 = vsub.s32 7, %v228
  %v230 = vrot.slane %v53, %v229
  %233 = vrot.lane.b32.xlu0 %v226, 126
  %v234 = vpop.permute.xlu0 %233
  %235 = vrot.lane.b32.xlu0 %v230, 126
  %v236 = vpop.permute.xlu0 %235
  %v239 = vmul.f32 %v52, %v234
  %v240 = vmul.f32 %v53, %v236
  %v241 = vsel %vm72, %v239, 0.0
  %242 = vadd.xlane.f32.xlu0 %v241
  %v243 = vpop.xlane.xlu0 %242
  %v244 = vsel %vm72, %v240, 0.0
  %245 = vadd.xlane.f32.xlu0 %v244
  %v246 = vpop.xlane.xlu0 %245
  %vm247 = vcmask 7168
  %v248 = vsel %vm247, %v75, %v99
  %v249 = vsel %vm247, %v78, %v102
  %v250 = vsel %vm72, %v248, %v123
  %v251 = vsel %vm72, %v249, %v126
  %vm252 = vcmask 23552
  %v253 = vsel %vm252, %v250, %v147
  %v254 = vsel %vm252, %v251, %v150
  %vm255 = vcmask 31744
  %v256 = vsel %vm255, %v253, %v171
  %v257 = vsel %vm255, %v254, %v174
  %vm258 = vcmask 39936
  %v259 = vsel %vm258, %v256, %v195
  %v260 = vsel %vm258, %v257, %v198
  %vm261 = vcmask 48128
  %v262 = vsel %vm261, %v259, %v219
  %v263 = vsel %vm261, %v260, %v222
  %vm264 = vcmask 56320
  %v265 = vsel %vm264, %v262, %v243
  %v266 = vsel %vm264, %v263, %v246
  %vm267 = vcmask 64512
  %v268 = vsel %vm267, %v265, -inf
  %269 = vmax.xlane.f32.xlu0 %v268
  %v270 = vpop.xlane.xlu0 %269
  %v271 = vsel %vm267, %v266, -inf
  %272 = vmax.xlane.f32.xlu0 %v271
  %v273 = vpop.xlane.xlu0 %272
  %v274 = vsub.f32 %v265, %v270
  %v275 = vsub.f32 %v266, %v273
  %v276 = vmul.f32 %v274, 1.442695
  %v277 = vpow.pop %v276
  %v278 = vmul.f32 %v275, 1.442695
  %v279 = vpow.pop %v278
  %v280 = vsel %vm267, %v277, 0.0
  %281 = vadd.xlane.f32.xlu0 %v280
  %v282 = vpop.xlane.xlu0 %281
  %v283 = vsel %vm267, %v279, 0.0
  %284 = vadd.xlane.f32.xlu0 %v283
  %v285 = vpop.xlane.xlu0 %284
  %v286 = vrcp.pop %v282
  %v287 = vrcp.pop %v285
  %v288 = vmul.f32 %v277, %v286
  %v289 = vmul.f32 %v279, %v287
  %291 = vset.pattern.permute.xlu0 0
  %292 = vperm.xlu0 %291, %v288
  %v293 = vpop.permute.xlu0 %292
  %296 = vset.pattern.permute.xlu0 0
  %297 = vperm.xlu0 %296, %v289
  %v298 = vpop.permute.xlu0 %297
  %v300 = vmul.f32 %v293, %v57
  %v301 = vmul.f32 %v298, %v61
  %302 = vset.pattern.permute.xlu0 1
  %303 = vperm.xlu0 %302, %v288
  %v304 = vpop.permute.xlu0 %303
  %306 = vset.pattern.permute.xlu0 1
  %307 = vperm.xlu0 %306, %v289
  %v308 = vpop.permute.xlu0 %307
  %v310 = vmul.f32 %v304, %v82
  %v311 = vmul.f32 %v308, %v86
  %v312 = vadd.f32 %v300, %v310
  %v313 = vadd.f32 %v301, %v311
  %314 = vset.pattern.permute.xlu0 2
  %315 = vperm.xlu0 %314, %v288
  %v316 = vpop.permute.xlu0 %315
  %318 = vset.pattern.permute.xlu0 2
  %319 = vperm.xlu0 %318, %v289
  %v320 = vpop.permute.xlu0 %319
  %v322 = vmul.f32 %v316, %v106
  %v323 = vmul.f32 %v320, %v110
  %v324 = vadd.f32 %v312, %v322
  %v325 = vadd.f32 %v313, %v323
  %326 = vset.pattern.permute.xlu0 3
  %327 = vperm.xlu0 %326, %v288
  %v328 = vpop.permute.xlu0 %327
  %330 = vset.pattern.permute.xlu0 3
  %331 = vperm.xlu0 %330, %v289
  %v332 = vpop.permute.xlu0 %331
  %v334 = vmul.f32 %v328, %v130
  %v335 = vmul.f32 %v332, %v134
  %v336 = vadd.f32 %v324, %v334
  %v337 = vadd.f32 %v325, %v335
  %338 = vset.pattern.permute.xlu0 4
  %339 = vperm.xlu0 %338, %v288
  %v340 = vpop.permute.xlu0 %339
  %342 = vset.pattern.permute.xlu0 4
  %343 = vperm.xlu0 %342, %v289
  %v344 = vpop.permute.xlu0 %343
  %v346 = vmul.f32 %v340, %v154
  %v347 = vmul.f32 %v344, %v158
  %v348 = vadd.f32 %v336, %v346
  %v349 = vadd.f32 %v337, %v347
  %350 = vset.pattern.permute.xlu0 5
  %351 = vperm.xlu0 %350, %v288
  %v352 = vpop.permute.xlu0 %351
  %354 = vset.pattern.permute.xlu0 5
  %355 = vperm.xlu0 %354, %v289
  %v356 = vpop.permute.xlu0 %355
  %v358 = vmul.f32 %v352, %v178
  %v359 = vmul.f32 %v356, %v182
  %v360 = vadd.f32 %v348, %v358
  %v361 = vadd.f32 %v349, %v359
  %362 = vset.pattern.permute.xlu0 6
  %363 = vperm.xlu0 %362, %v288
  %v364 = vpop.permute.xlu0 %363
  %366 = vset.pattern.permute.xlu0 6
  %367 = vperm.xlu0 %366, %v289
  %v368 = vpop.permute.xlu0 %367
  %v370 = vmul.f32 %v364, %v202
  %v371 = vmul.f32 %v368, %v206
  %v372 = vadd.f32 %v360, %v370
  %v373 = vadd.f32 %v361, %v371
  %374 = vset.pattern.permute.xlu0 7
  %375 = vperm.xlu0 %374, %v288
  %v376 = vpop.permute.xlu0 %375
  %378 = vset.pattern.permute.xlu0 7
  %379 = vperm.xlu0 %378, %v289
  %v380 = vpop.permute.xlu0 %379
  %v382 = vmul.f32 %v376, %v226
  %v383 = vmul.f32 %v380, %v230
  %v384 = vadd.f32 %v372, %v382
  %v385 = vadd.f32 %v373, %v383
  %387 = vset.pattern.permute.xlu0 4
  %388 = vperm.xlu0 %387, %v384
  %v389 = vpop.permute.xlu0 %388
  %392 = vset.pattern.permute.xlu0 4
  %393 = vperm.xlu0 %392, %v385
  %v394 = vpop.permute.xlu0 %393
  %v396 = vmul.f32 %v389, %v29
  %v397 = vmul.f32 %v394, %v29
  %398 = vset.pattern.permute.xlu0 5
  %399 = vperm.xlu0 %398, %v384
  %v400 = vpop.permute.xlu0 %399
  %402 = vset.pattern.permute.xlu0 5
  %403 = vperm.xlu0 %402, %v385
  %v404 = vpop.permute.xlu0 %403
  %v406 = vmul.f32 %v400, %v43
  %v407 = vmul.f32 %v404, %v43
  %v408 = vadd.f32 %v396, %v406
  %v409 = vadd.f32 %v397, %v407
  %v410 = vadd.f32 %v408, %v51
  %v411 = vadd.f32 %v409, %v51
  %413 = vset.pattern.permute.xlu0 6
  %414 = vperm.xlu0 %413, %v410
  %v415 = vpop.permute.xlu0 %414
  %418 = vset.pattern.permute.xlu0 6
  %419 = vperm.xlu0 %418, %v411
  %v420 = vpop.permute.xlu0 %419
  %v422 = vmul.f32 %v415, %v29
  %v423 = vmul.f32 %v420, %v29
  %424 = vset.pattern.permute.xlu0 7
  %425 = vperm.xlu0 %424, %v410
  %v426 = vpop.permute.xlu0 %425
  %428 = vset.pattern.permute.xlu0 7
  %429 = vperm.xlu0 %428, %v411
  %v430 = vpop.permute.xlu0 %429
  %v432 = vmul.f32 %v426, %v43
  %v433 = vmul.f32 %v430, %v43
  %v434 = vadd.f32 %v422, %v432
  %v435 = vadd.f32 %v423, %v433
  %v436 = vadd.f32 %v434, %v51
  %v437 = vadd.f32 %v435, %v51
  %439 = vset.pattern.permute.xlu0 0
  %440 = vperm.xlu0 %439, %v13
  %v441 = vpop.permute.xlu0 %440
  %444 = vset.pattern.permute.xlu0 0
  %445 = vperm.xlu0 %444, %v14
  %v446 = vpop.permute.xlu0 %445
  %v448 = vmul.f32 %v441, %v29
  %v449 = vmul.f32 %v446, %v29
  %450 = vset.pattern.permute.xlu0 1
  %451 = vperm.xlu0 %450, %v13
  %v452 = vpop.permute.xlu0 %451
  %454 = vset.pattern.permute.xlu0 1
  %455 = vperm.xlu0 %454, %v14
  %v456 = vpop.permute.xlu0 %455
  %v458 = vmul.f32 %v452, %v43
  %v459 = vmul.f32 %v456, %v43
  %v460 = vadd.f32 %v448, %v458
  %v461 = vadd.f32 %v449, %v459
  %v462 = vadd.f32 %v460, %v51
  %v463 = vadd.f32 %v461, %v51
  %v464 = vlaneseq
  %v465 = vshrl.u32 %v464, 7
  %v466 = vsub.s32 0, %v465
  %v467 = vrot.slane %v462, %v466
  %v468 = vlaneseq
  %v469 = vshrl.u32 %v468, 7
  %v470 = vsub.s32 0, %v469
  %v471 = vrot.slane %v463, %v470
  %474 = vrot.lane.b32.xlu0 %v467, 126
  %v475 = vpop.permute.xlu0 %474
  %476 = vrot.lane.b32.xlu0 %v471, 126
  %v477 = vpop.permute.xlu0 %476
  %v480 = vmul.f32 %v436, %v475
  %v481 = vmul.f32 %v437, %v477
  %v482 = vsel %vm72, %v480, 0.0
  %483 = vadd.xlane.f32.xlu0 %v482
  %v484 = vpop.xlane.xlu0 %483
  %v485 = vsel %vm72, %v481, 0.0
  %486 = vadd.xlane.f32.xlu0 %v485
  %v487 = vpop.xlane.xlu0 %486
  %v488 = vlaneseq
  %v489 = vshrl.u32 %v488, 7
  %v490 = vsub.s32 1, %v489
  %v491 = vrot.slane %v462, %v490
  %v492 = vlaneseq
  %v493 = vshrl.u32 %v492, 7
  %v494 = vsub.s32 1, %v493
  %v495 = vrot.slane %v463, %v494
  %498 = vrot.lane.b32.xlu0 %v491, 126
  %v499 = vpop.permute.xlu0 %498
  %500 = vrot.lane.b32.xlu0 %v495, 126
  %v501 = vpop.permute.xlu0 %500
  %v504 = vmul.f32 %v436, %v499
  %v505 = vmul.f32 %v437, %v501
  %v506 = vsel %vm72, %v504, 0.0
  %507 = vadd.xlane.f32.xlu0 %v506
  %v508 = vpop.xlane.xlu0 %507
  %v509 = vsel %vm72, %v505, 0.0
  %510 = vadd.xlane.f32.xlu0 %v509
  %v511 = vpop.xlane.xlu0 %510
  %v512 = vlaneseq
  %v513 = vshrl.u32 %v512, 7
  %v514 = vsub.s32 2, %v513
  %v515 = vrot.slane %v462, %v514
  %v516 = vlaneseq
  %v517 = vshrl.u32 %v516, 7
  %v518 = vsub.s32 2, %v517
  %v519 = vrot.slane %v463, %v518
  %522 = vrot.lane.b32.xlu0 %v515, 126
  %v523 = vpop.permute.xlu0 %522
  %524 = vrot.lane.b32.xlu0 %v519, 126
  %v525 = vpop.permute.xlu0 %524
  %v528 = vmul.f32 %v436, %v523
  %v529 = vmul.f32 %v437, %v525
  %v530 = vsel %vm72, %v528, 0.0
  %531 = vadd.xlane.f32.xlu0 %v530
  %v532 = vpop.xlane.xlu0 %531
  %v533 = vsel %vm72, %v529, 0.0
  %534 = vadd.xlane.f32.xlu0 %v533
  %v535 = vpop.xlane.xlu0 %534
  %v536 = vlaneseq
  %v537 = vshrl.u32 %v536, 7
  %v538 = vsub.s32 3, %v537
  %v539 = vrot.slane %v462, %v538
  %v540 = vlaneseq
  %v541 = vshrl.u32 %v540, 7
  %v542 = vsub.s32 3, %v541
  %v543 = vrot.slane %v463, %v542
  %546 = vrot.lane.b32.xlu0 %v539, 126
  %v547 = vpop.permute.xlu0 %546
  %548 = vrot.lane.b32.xlu0 %v543, 126
  %v549 = vpop.permute.xlu0 %548
  %v552 = vmul.f32 %v436, %v547
  %v553 = vmul.f32 %v437, %v549
  %v554 = vsel %vm72, %v552, 0.0
  %555 = vadd.xlane.f32.xlu0 %v554
  %v556 = vpop.xlane.xlu0 %555
  %v557 = vsel %vm72, %v553, 0.0
  %558 = vadd.xlane.f32.xlu0 %v557
  %v559 = vpop.xlane.xlu0 %558
  %v560 = vlaneseq
  %v561 = vshrl.u32 %v560, 7
  %v562 = vsub.s32 4, %v561
  %v563 = vrot.slane %v462, %v562
  %v564 = vlaneseq
  %v565 = vshrl.u32 %v564, 7
  %v566 = vsub.s32 4, %v565
  %v567 = vrot.slane %v463, %v566
  %570 = vrot.lane.b32.xlu0 %v563, 126
  %v571 = vpop.permute.xlu0 %570
  %572 = vrot.lane.b32.xlu0 %v567, 126
  %v573 = vpop.permute.xlu0 %572
  %v576 = vmul.f32 %v436, %v571
  %v577 = vmul.f32 %v437, %v573
  %v578 = vsel %vm72, %v576, 0.0
  %579 = vadd.xlane.f32.xlu0 %v578
  %v580 = vpop.xlane.xlu0 %579
  %v581 = vsel %vm72, %v577, 0.0
  %582 = vadd.xlane.f32.xlu0 %v581
  %v583 = vpop.xlane.xlu0 %582
  %v584 = vlaneseq
  %v585 = vshrl.u32 %v584, 7
  %v586 = vsub.s32 5, %v585
  %v587 = vrot.slane %v462, %v586
  %v588 = vlaneseq
  %v589 = vshrl.u32 %v588, 7
  %v590 = vsub.s32 5, %v589
  %v591 = vrot.slane %v463, %v590
  %594 = vrot.lane.b32.xlu0 %v587, 126
  %v595 = vpop.permute.xlu0 %594
  %596 = vrot.lane.b32.xlu0 %v591, 126
  %v597 = vpop.permute.xlu0 %596
  %v600 = vmul.f32 %v436, %v595
  %v601 = vmul.f32 %v437, %v597
  %v602 = vsel %vm72, %v600, 0.0
  %603 = vadd.xlane.f32.xlu0 %v602
  %v604 = vpop.xlane.xlu0 %603
  %v605 = vsel %vm72, %v601, 0.0
  %606 = vadd.xlane.f32.xlu0 %v605
  %v607 = vpop.xlane.xlu0 %606
  %v608 = vlaneseq
  %v609 = vshrl.u32 %v608, 7
  %v610 = vsub.s32 6, %v609
  %v611 = vrot.slane %v462, %v610
  %v612 = vlaneseq
  %v613 = vshrl.u32 %v612, 7
  %v614 = vsub.s32 6, %v613
  %v615 = vrot.slane %v463, %v614
  %618 = vrot.lane.b32.xlu0 %v611, 126
  %v619 = vpop.permute.xlu0 %618
  %620 = vrot.lane.b32.xlu0 %v615, 126
  %v621 = vpop.permute.xlu0 %620
  %v624 = vmul.f32 %v436, %v619
  %v625 = vmul.f32 %v437, %v621
  %v626 = vsel %vm72, %v624, 0.0
  %627 = vadd.xlane.f32.xlu0 %v626
  %v628 = vpop.xlane.xlu0 %627
  %v629 = vsel %vm72, %v625, 0.0
  %630 = vadd.xlane.f32.xlu0 %v629
  %v631 = vpop.xlane.xlu0 %630
  %v632 = vlaneseq
  %v633 = vshrl.u32 %v632, 7
  %v634 = vsub.s32 7, %v633
  %v635 = vrot.slane %v462, %v634
  %v636 = vlaneseq
  %v637 = vshrl.u32 %v636, 7
  %v638 = vsub.s32 7, %v637
  %v639 = vrot.slane %v463, %v638
  %642 = vrot.lane.b32.xlu0 %v635, 126
  %v643 = vpop.permute.xlu0 %642
  %644 = vrot.lane.b32.xlu0 %v639, 126
  %v645 = vpop.permute.xlu0 %644
  %v648 = vmul.f32 %v436, %v643
  %v649 = vmul.f32 %v437, %v645
  %v650 = vsel %vm72, %v648, 0.0
  %651 = vadd.xlane.f32.xlu0 %v650
  %v652 = vpop.xlane.xlu0 %651
  %v653 = vsel %vm72, %v649, 0.0
  %654 = vadd.xlane.f32.xlu0 %v653
  %v655 = vpop.xlane.xlu0 %654
  %v656 = vsel %vm247, %v484, %v508
  %v657 = vsel %vm247, %v487, %v511
  %v658 = vsel %vm72, %v656, %v532
  %v659 = vsel %vm72, %v657, %v535
  %v660 = vsel %vm252, %v658, %v556
  %v661 = vsel %vm252, %v659, %v559
  %v662 = vsel %vm255, %v660, %v580
  %v663 = vsel %vm255, %v661, %v583
  %v664 = vsel %vm258, %v662, %v604
  %v665 = vsel %vm258, %v663, %v607
  %v666 = vsel %vm261, %v664, %v628
  %v667 = vsel %vm261, %v665, %v631
  %v668 = vsel %vm264, %v666, %v652
  %v669 = vsel %vm264, %v667, %v655
  %v670 = vsel %vm267, %v668, -inf
  %671 = vmax.xlane.f32.xlu0 %v670
  %v672 = vpop.xlane.xlu0 %671
  %v673 = vsel %vm267, %v669, -inf
  %674 = vmax.xlane.f32.xlu0 %v673
  %v675 = vpop.xlane.xlu0 %674
  %v676 = vsub.f32 %v668, %v672
  %v677 = vsub.f32 %v669, %v675
  %v678 = vmul.f32 %v676, 1.442695
  %v679 = vpow.pop %v678
  %v680 = vmul.f32 %v677, 1.442695
  %v681 = vpow.pop %v680
  %v682 = vsel %vm267, %v679, 0.0
  %683 = vadd.xlane.f32.xlu0 %v682
  %v684 = vpop.xlane.xlu0 %683
  %v685 = vsel %vm267, %v681, 0.0
  %686 = vadd.xlane.f32.xlu0 %v685
  %v687 = vpop.xlane.xlu0 %686
  %v688 = vrcp.pop %v684
  %v689 = vrcp.pop %v687
  %v690 = vmul.f32 %v679, %v688
  %v691 = vmul.f32 %v681, %v689
  %693 = vset.pattern.permute.xlu0 0
  %694 = vperm.xlu0 %693, %v690
  %v695 = vpop.permute.xlu0 %694
  %698 = vset.pattern.permute.xlu0 0
  %699 = vperm.xlu0 %698, %v691
  %v700 = vpop.permute.xlu0 %699
  %v702 = vmul.f32 %v695, %v467
  %v703 = vmul.f32 %v700, %v471
  %704 = vset.pattern.permute.xlu0 1
  %705 = vperm.xlu0 %704, %v690
  %v706 = vpop.permute.xlu0 %705
  %708 = vset.pattern.permute.xlu0 1
  %709 = vperm.xlu0 %708, %v691
  %v710 = vpop.permute.xlu0 %709
  %v712 = vmul.f32 %v706, %v491
  %v713 = vmul.f32 %v710, %v495
  %v714 = vadd.f32 %v702, %v712
  %v715 = vadd.f32 %v703, %v713
  %716 = vset.pattern.permute.xlu0 2
  %717 = vperm.xlu0 %716, %v690
  %v718 = vpop.permute.xlu0 %717
  %720 = vset.pattern.permute.xlu0 2
  %721 = vperm.xlu0 %720, %v691
  %v722 = vpop.permute.xlu0 %721
  %v724 = vmul.f32 %v718, %v515
  %v725 = vmul.f32 %v722, %v519
  %v726 = vadd.f32 %v714, %v724
  %v727 = vadd.f32 %v715, %v725
  %728 = vset.pattern.permute.xlu0 3
  %729 = vperm.xlu0 %728, %v690
  %v730 = vpop.permute.xlu0 %729
  %732 = vset.pattern.permute.xlu0 3
  %733 = vperm.xlu0 %732, %v691
  %v734 = vpop.permute.xlu0 %733
  %v736 = vmul.f32 %v730, %v539
  %v737 = vmul.f32 %v734, %v543
  %v738 = vadd.f32 %v726, %v736
  %v739 = vadd.f32 %v727, %v737
  %740 = vset.pattern.permute.xlu0 4
  %741 = vperm.xlu0 %740, %v690
  %v742 = vpop.permute.xlu0 %741
  %744 = vset.pattern.permute.xlu0 4
  %745 = vperm.xlu0 %744, %v691
  %v746 = vpop.permute.xlu0 %745
  %v748 = vmul.f32 %v742, %v563
  %v749 = vmul.f32 %v746, %v567
  %v750 = vadd.f32 %v738, %v748
  %v751 = vadd.f32 %v739, %v749
  %752 = vset.pattern.permute.xlu0 5
  %753 = vperm.xlu0 %752, %v690
  %v754 = vpop.permute.xlu0 %753
  %756 = vset.pattern.permute.xlu0 5
  %757 = vperm.xlu0 %756, %v691
  %v758 = vpop.permute.xlu0 %757
  %v760 = vmul.f32 %v754, %v587
  %v761 = vmul.f32 %v758, %v591
  %v762 = vadd.f32 %v750, %v760
  %v763 = vadd.f32 %v751, %v761
  %764 = vset.pattern.permute.xlu0 6
  %765 = vperm.xlu0 %764, %v690
  %v766 = vpop.permute.xlu0 %765
  %768 = vset.pattern.permute.xlu0 6
  %769 = vperm.xlu0 %768, %v691
  %v770 = vpop.permute.xlu0 %769
  %v772 = vmul.f32 %v766, %v611
  %v773 = vmul.f32 %v770, %v615
  %v774 = vadd.f32 %v762, %v772
  %v775 = vadd.f32 %v763, %v773
  %776 = vset.pattern.permute.xlu0 7
  %777 = vperm.xlu0 %776, %v690
  %v778 = vpop.permute.xlu0 %777
  %780 = vset.pattern.permute.xlu0 7
  %781 = vperm.xlu0 %780, %v691
  %v782 = vpop.permute.xlu0 %781
  %v784 = vmul.f32 %v778, %v635
  %v785 = vmul.f32 %v782, %v639
  %v786 = vadd.f32 %v774, %v784
  %v787 = vadd.f32 %v775, %v785
  %789 = vset.pattern.permute.xlu0 4
  %790 = vperm.xlu0 %789, %v786
  %v791 = vpop.permute.xlu0 %790
  %794 = vset.pattern.permute.xlu0 4
  %795 = vperm.xlu0 %794, %v787
  %v796 = vpop.permute.xlu0 %795
  %v798 = vmul.f32 %v791, %v29
  %v799 = vmul.f32 %v796, %v29
  %800 = vset.pattern.permute.xlu0 5
  %801 = vperm.xlu0 %800, %v786
  %v802 = vpop.permute.xlu0 %801
  %804 = vset.pattern.permute.xlu0 5
  %805 = vperm.xlu0 %804, %v787
  %v806 = vpop.permute.xlu0 %805
  %v808 = vmul.f32 %v802, %v43
  %v809 = vmul.f32 %v806, %v43
  %v810 = vadd.f32 %v798, %v808
  %v811 = vadd.f32 %v799, %v809
  %v812 = vadd.f32 %v810, %v51
  %v813 = vadd.f32 %v811, %v51
  %815 = vset.pattern.permute.xlu0 8
  %816 = vperm.xlu0 %815, %v812
  %v817 = vpop.permute.xlu0 %816
  %820 = vset.pattern.permute.xlu0 8
  %821 = vperm.xlu0 %820, %v813
  %v822 = vpop.permute.xlu0 %821
  %v824 = vmul.f32 %v817, %v29
  %v825 = vmul.f32 %v822, %v29
  %826 = vset.pattern.permute.xlu0 9
  %827 = vperm.xlu0 %826, %v812
  %v828 = vpop.permute.xlu0 %827
  %830 = vset.pattern.permute.xlu0 9
  %831 = vperm.xlu0 %830, %v813
  %v832 = vpop.permute.xlu0 %831
  %v834 = vmul.f32 %v828, %v43
  %v835 = vmul.f32 %v832, %v43
  %v836 = vadd.f32 %v824, %v834
  %v837 = vadd.f32 %v825, %v835
  %v838 = vadd.f32 %v836, %v51
  %v839 = vadd.f32 %v837, %v51
  %v840 = vmax.f32 %v838, 0.0
  %v841 = vmax.f32 %v839, 0.0
  %843 = vrot.lane.b32.xlu0 %v29, 120
  %v844 = vpop.permute.xlu0 %843
  %v846 = vmul.f32 %v840, %v844
  %v847 = vmul.f32 %v841, %v844
  %850 = vrot.lane.b32.xlu0 %v846, 118
  %v851 = vpop.permute.xlu0 %850
  %852 = vrot.lane.b32.xlu0 %v847, 118
  %v853 = vpop.permute.xlu0 %852
  %v856 = vsel %vm267, %v851, 0.0
  %857 = vadd.xlane.f32.xlu0 %v856
  %v858 = vpop.xlane.xlu0 %857
  %v859 = vsel %vm267, %v853, 0.0
  %860 = vadd.xlane.f32.xlu0 %v859
  %v861 = vpop.xlane.xlu0 %860
  %863 = vrot.lane.b32.xlu0 %v43, 120
  %v864 = vpop.permute.xlu0 %863
  %v866 = vmul.f32 %v840, %v864
  %v867 = vmul.f32 %v841, %v864
  %870 = vrot.lane.b32.xlu0 %v866, 118
  %v871 = vpop.permute.xlu0 %870
  %872 = vrot.lane.b32.xlu0 %v867, 118
  %v873 = vpop.permute.xlu0 %872
  %v876 = vsel %vm267, %v871, 0.0
  %877 = vadd.xlane.f32.xlu0 %v876
  %v878 = vpop.xlane.xlu0 %877
  %v879 = vsel %vm267, %v873, 0.0
  %880 = vadd.xlane.f32.xlu0 %v879
  %v881 = vpop.xlane.xlu0 %880
  %v882 = vsel %vm247, %v858, %v878
  %v883 = vsel %vm247, %v861, %v881
  %885 = vrot.lane.b32.xlu0 %v51, 110
  %v886 = vpop.permute.xlu0 %885
  %v888 = vadd.f32 %v882, %v886
  %v889 = vadd.f32 %v883, %v886
  %890 = vst.msk [vmem:[%s2] sm:$0xff] %vm72, %v888
  %891 = vst.msk [vmem:[%s2 + $0x8] sm:$0xff] %vm72, %v889
  // Predicated region
  $region10: #{tpu_custom_call.1} parent=0 // pred_check
    _
  $region11: #{tpu_custom_call.1} parent=0 // pred_check_branch
    %893 = sbr.rel (0) target = $region13
  $region12: #{tpu_custom_call.1} parent=0 // pred_region
    _
  $region13: #{tpu_custom_call.1} parent=0 // pred_fallthru
    _
  // Predicated region
  $region14: #{tpu_custom_call.1} parent=0 // pred_check
    _
  $region15: #{tpu_custom_call.1} parent=0 // pred_check_branch
    %895 = sbr.rel (0) target = $region17
  $region16: #{tpu_custom_call.1} parent=0 // pred_region
    _
  $region17: #{tpu_custom_call.1} parent=0 // pred_fallthru
    _

</llo_original>
